<compile_context>
chip_gen: v7x
topology: tpu7x:2x2x1
jax: 0.10.0
libtpu: 0.0.40
codegen_flags: <defaults>
</compile_context>

<pallas_src>
import functools

import jax
import jax.numpy as jnp
from jax.experimental import pallas as pl
from jax.experimental.pallas import tpu as pltpu


def _autoencoder_kernel(
    x_ref,
    w1_ref, b1_ref,
    w2_ref, b2_ref,
    w3_ref, b3_ref,
    w4_ref, b4_ref,
    w5_ref, b5_ref,
    w6_ref, b6_ref,
    out_ref,
):
    """Full encoder+decoder MLP for one batch tile, entirely in VMEM."""
    h = x_ref[...].astype(jnp.float32)

    def layer(h, w_ref, b_ref, *, relu):
        # bf16 operands, f32 accumulation on the MXU; bias/ReLU in f32 (VPU).
        y = jnp.dot(
            h.astype(jnp.bfloat16),
            w_ref[...],
            preferred_element_type=jnp.float32,
        )
        y = y + b_ref[...]
        return jnp.maximum(y, 0.0) if relu else y

    # Encoder: F -> 64 -> 32 -> 16  (ReLU after each)
    h = layer(h, w1_ref, b1_ref, relu=True)
    h = layer(h, w2_ref, b2_ref, relu=True)
    h = layer(h, w3_ref, b3_ref, relu=True)

    # Decoder: 16 -> 32 -> 64 -> F  (ReLU, ReLU, Sigmoid)
    h = layer(h, w4_ref, b4_ref, relu=True)
    h = layer(h, w5_ref, b5_ref, relu=True)
    logits = layer(h, w6_ref, b6_ref, relu=False)

    # sigmoid(x) = 1 / (1 + exp(-x)); reciprocal goes to the EUP slot.
    recon = pl.reciprocal(1.0 + jnp.exp(-logits), approx=True)

    # TODO(synk): with F=32 the store uses only 32 of 128 lanes (masked vst);
    # a lane-dense repack is possible but second-order at these sizes.
    out_ref[...] = recon.astype(out_ref.dtype)


def _param_spec(shape):
    """Whole (grid-invariant) array resident in VMEM for every grid step."""
    return pl.BlockSpec(shape, lambda i: (0, 0))


@functools.partial(jax.jit, static_argnames=("batch_tile",))
def _forward_impl(x, params, *, batch_tile):
    B, F = x.shape

    # Cast weights to bf16 once (halves weight VMEM/DMA, native MXU dtype).
    w = [params[f"w{i}"].astype(jnp.bfloat16) for i in range(1, 7)]
    b = [params[f"b{i}"].astype(jnp.float32) for i in range(1, 7)]

    grid = (B // batch_tile,)

    flops = 2 * B * (F * 64 + 64 * 32 + 32 * 16 + 16 * 32 + 32 * 64 + 64 * F)
    transcendentals = B * F  # exp in the sigmoid
    bytes_accessed = (
        2 * B * F * 4                       # x in + recon out (f32)
        + sum(int(wi.size) * 2 for wi in w)  # bf16 weights
        + sum(int(bi.size) * 4 for bi in b)  # f32 biases
    )

    in_specs = [pl.BlockSpec((batch_tile, F), lambda i: (i, 0))]  # x tile
    operands = [x]
    for wi, bi in zip(w, b):
        in_specs.append(_param_spec(wi.shape))
        in_specs.append(_param_spec(bi.shape))
        operands.append(wi)
        operands.append(bi)

    return pl.pallas_call(
        _autoencoder_kernel,
        out_shape=jax.ShapeDtypeStruct((B, F), x.dtype),
        grid_spec=pltpu.PrefetchScalarGridSpec(
            num_scalar_prefetch=0,
            grid=grid,
            in_specs=in_specs,
            out_specs=pl.BlockSpec((batch_tile, F), lambda i: (i, 0)),
        ),
        compiler_params=pltpu.CompilerParams(
            dimension_semantics=("parallel",),
        ),
        cost_estimate=pl.CostEstimate(
            flops=flops,
            transcendentals=transcendentals,
            bytes_accessed=bytes_accessed,
        ),
    )(*operands)


def _round_up(n, m):
    return ((n + m - 1) // m) * m


def ddos_autoencoder_forward(x, params, *, batch_tile=1024):
    """x: [B, F] float32. params: dict of transposed weights/biases.

    Picks an effective batch tile <= batch_tile (multiple of 8), pads the
    batch if needed, and keeps the grid >= 2 when the batch is large enough
    so both v7x TensorCores get work.
    """
    B, F = x.shape

    tile = min(int(batch_tile), _round_up(B, 8))
    tile = max(8, (tile // 8) * 8)
    if _round_up(B, tile) // tile < 2 and B >= 16:
        tile = max(8, ((B // 2) // 8) * 8)

    B_pad = _round_up(B, tile)
    if B_pad != B:
        x = jnp.pad(x, ((0, B_pad - B), (0, 0)))

    out = _forward_impl(x, params, batch_tile=tile)
    return out[:B]


def init_params(key, input_features):
    """Deterministic init mirroring nn.Linear's U(-1/sqrt(fan_in), +1/sqrt(fan_in)).

    Weights are stored as [in, out] (transposed w.r.t. PyTorch's [out, in]),
    biases as [1, out]. Kept in f32 here; the wrapper casts weights to bf16.
    """
    dims = [
        (input_features, 64),
        (64, 32),
        (32, 16),
        (16, 32),
        (32, 64),
        (64, input_features),
    ]
    params = {}
    for idx, (fan_in, fan_out) in enumerate(dims, start=1):
        key, kw, kb = jax.random.split(key, 3)
        bound = 1.0 / jnp.sqrt(jnp.float32(fan_in))
        params[f"w{idx}"] = jax.random.uniform(
            kw, (fan_in, fan_out), jnp.float32, minval=-bound, maxval=bound
        )
        params[f"b{idx}"] = jax.random.uniform(
            kb, (1, fan_out), jnp.float32, minval=-bound, maxval=bound
        )
    return params


def _reference_forward(x, params, *, bf16_matmul):
    """Plain-JAX reference matching the PyTorch module semantics.

    With bf16_matmul=True it mirrors the kernel's numerics (bf16 operands,
    f32 accumulation) for a tight comparison.
    """
    def dot(h, w):
        if bf16_matmul:
            return jnp.dot(
                h.astype(jnp.bfloat16),
                w.astype(jnp.bfloat16),
                preferred_element_type=jnp.float32,
            )
        return jnp.dot(h, w, preferred_element_type=jnp.float32)

    h = x
    for i in range(1, 6):
        h = jnp.maximum(dot(h, params[f"w{i}"]) + params[f"b{i}"], 0.0)
    logits = dot(h, params["w6"]) + params["b6"]
    return jax.nn.sigmoid(logits)


if __name__ == "__main__":
    INPUT_FEATURES = 32
    BATCH = 256  # small example; wrapper picks tile=128 -> grid=2

    key = jax.random.PRNGKey(0)
    key, kx = jax.random.split(key)
    x = jax.random.normal(kx, (BATCH, INPUT_FEATURES), jnp.float32)

    params = init_params(key, INPUT_FEATURES)

    out = ddos_autoencoder_forward(x, params)
    out = jax.block_until_ready(out)
    assert out.shape == (BATCH, INPUT_FEATURES)

    # Tight check vs. a reference that mirrors the kernel's bf16-matmul numerics.
    ref_matched = _reference_forward(x, params, bf16_matmul=True)
    assert jnp.allclose(out, ref_matched, atol=5e-3, rtol=5e-3), (
        "mismatch vs bf16-matched reference"
    )

    # Looser sanity check vs. the full-f32 PyTorch-equivalent reference.
    ref_f32 = _reference_forward(x, params, bf16_matmul=False)
    assert jnp.allclose(out, ref_f32, atol=5e-2, rtol=5e-2), (
        "mismatch vs f32 reference"
    )

    print("KERNEL_OK")
</pallas_src>

<mosaic_0001>
module attributes {stable_mosaic.version = 11 : i64} {
  func.func @_autoencoder_kernel(%arg0: i32, %arg1: memref<128x32xf32, #tpu.memory_space<vmem>>, %arg2: memref<32x64xbf16, #tpu.memory_space<vmem>>, %arg3: memref<1x64xf32, #tpu.memory_space<vmem>>, %arg4: memref<64x32xbf16, #tpu.memory_space<vmem>>, %arg5: memref<1x32xf32, #tpu.memory_space<vmem>>, %arg6: memref<32x16xbf16, #tpu.memory_space<vmem>>, %arg7: memref<1x16xf32, #tpu.memory_space<vmem>>, %arg8: memref<16x32xbf16, #tpu.memory_space<vmem>>, %arg9: memref<1x32xf32, #tpu.memory_space<vmem>>, %arg10: memref<32x64xbf16, #tpu.memory_space<vmem>>, %arg11: memref<1x64xf32, #tpu.memory_space<vmem>>, %arg12: memref<64x32xbf16, #tpu.memory_space<vmem>>, %arg13: memref<1x32xf32, #tpu.memory_space<vmem>>, %arg14: memref<128x32xf32, #tpu.memory_space<vmem>>) attributes {dimension_semantics = [#tpu.dimension_semantics<parallel>], iteration_bounds = array<i64: 2>, scalar_prefetch = 0 : i64, scratch_operands = 0 : i64, tpu.core_type = #tpu.core_type<tc>, window_params = [{transform_indices = @transform_0, window_bounds = array<i64: 128, 32>}, {pipeline_mode = #tpu.pipeline_mode<synchronous>, transform_indices = @transform_1, window_bounds = array<i64: 32, 64>}, {pipeline_mode = #tpu.pipeline_mode<synchronous>, transform_indices = @transform_2, window_bounds = array<i64: 1, 64>}, {pipeline_mode = #tpu.pipeline_mode<synchronous>, transform_indices = @transform_3, window_bounds = array<i64: 64, 32>}, {pipeline_mode = #tpu.pipeline_mode<synchronous>, transform_indices = @transform_4, window_bounds = array<i64: 1, 32>}, {pipeline_mode = #tpu.pipeline_mode<synchronous>, transform_indices = @transform_5, window_bounds = array<i64: 32, 16>}, {pipeline_mode = #tpu.pipeline_mode<synchronous>, transform_indices = @transform_6, window_bounds = array<i64: 1, 16>}, {pipeline_mode = #tpu.pipeline_mode<synchronous>, transform_indices = @transform_7, window_bounds = array<i64: 16, 32>}, {pipeline_mode = #tpu.pipeline_mode<synchronous>, transform_indices = @transform_8, window_bounds = array<i64: 1, 32>}, {pipeline_mode = #tpu.pipeline_mode<synchronous>, transform_indices = @transform_9, window_bounds = array<i64: 32, 64>}, {pipeline_mode = #tpu.pipeline_mode<synchronous>, transform_indices = @transform_10, window_bounds = array<i64: 1, 64>}, {pipeline_mode = #tpu.pipeline_mode<synchronous>, transform_indices = @transform_11, window_bounds = array<i64: 64, 32>}, {pipeline_mode = #tpu.pipeline_mode<synchronous>, transform_indices = @transform_12, window_bounds = array<i64: 1, 32>}, {transform_indices = @transform_13, window_bounds = array<i64: 128, 32>}]} {
    %c0 = arith.constant 0 : index
    %c0_0 = arith.constant 0 : index
    %0 = vector.load %arg1[%c0, %c0_0] : memref<128x32xf32, #tpu.memory_space<vmem>>, vector<128x32xf32>
    %1 = arith.truncf %0 : vector<128x32xf32> to vector<128x32xbf16>
    %c0_1 = arith.constant 0 : index
    %c0_2 = arith.constant 0 : index
    %2 = vector.load %arg2[%c0_1, %c0_2] : memref<32x64xbf16, #tpu.memory_space<vmem>>, vector<32x64xbf16>
    %cst = arith.constant dense<0.000000e+00> : vector<128x64xf32>
    %3 = tpu.matmul %1, %2, %cst {dimension_numbers = #tpu.dot_dimension_numbers<[1], [0], [0], [1], [0, 0, 1, 1], [], []>} : vector<128x32xbf16>, vector<32x64xbf16>, vector<128x64xf32> -> vector<128x64xf32>
    %c0_3 = arith.constant 0 : index
    %c0_4 = arith.constant 0 : index
    %4 = vector.load %arg3[%c0_3, %c0_4] : memref<1x64xf32, #tpu.memory_space<vmem>>, vector<1x64xf32>
    %5 = vector.broadcast %4 : vector<1x64xf32> to vector<128x64xf32>
    %6 = arith.addf %3, %5 : vector<128x64xf32>
    %cst_5 = arith.constant 0.000000e+00 : f32
    %7 = vector.broadcast %cst_5 : f32 to vector<128x64xf32>
    %8 = arith.maximumf %6, %7 : vector<128x64xf32>
    %9 = arith.truncf %8 : vector<128x64xf32> to vector<128x64xbf16>
    %c0_6 = arith.constant 0 : index
    %c0_7 = arith.constant 0 : index
    %10 = vector.load %arg4[%c0_6, %c0_7] : memref<64x32xbf16, #tpu.memory_space<vmem>>, vector<64x32xbf16>
    %cst_8 = arith.constant dense<0.000000e+00> : vector<128x32xf32>
    %11 = tpu.matmul %9, %10, %cst_8 {dimension_numbers = #tpu.dot_dimension_numbers<[1], [0], [0], [1], [0, 0, 1, 1], [], []>} : vector<128x64xbf16>, vector<64x32xbf16>, vector<128x32xf32> -> vector<128x32xf32>
    %c0_9 = arith.constant 0 : index
    %c0_10 = arith.constant 0 : index
    %12 = vector.load %arg5[%c0_9, %c0_10] : memref<1x32xf32, #tpu.memory_space<vmem>>, vector<1x32xf32>
    %13 = vector.broadcast %12 : vector<1x32xf32> to vector<128x32xf32>
    %14 = arith.addf %11, %13 : vector<128x32xf32>
    %cst_11 = arith.constant 0.000000e+00 : f32
    %15 = vector.broadcast %cst_11 : f32 to vector<128x32xf32>
    %16 = arith.maximumf %14, %15 : vector<128x32xf32>
    %17 = arith.truncf %16 : vector<128x32xf32> to vector<128x32xbf16>
    %c0_12 = arith.constant 0 : index
    %c0_13 = arith.constant 0 : index
    %18 = vector.load %arg6[%c0_12, %c0_13] : memref<32x16xbf16, #tpu.memory_space<vmem>>, vector<32x16xbf16>
    %cst_14 = arith.constant dense<0.000000e+00> : vector<128x16xf32>
    %19 = tpu.matmul %17, %18, %cst_14 {dimension_numbers = #tpu.dot_dimension_numbers<[1], [0], [0], [1], [0, 0, 1, 1], [], []>} : vector<128x32xbf16>, vector<32x16xbf16>, vector<128x16xf32> -> vector<128x16xf32>
    %c0_15 = arith.constant 0 : index
    %c0_16 = arith.constant 0 : index
    %20 = vector.load %arg7[%c0_15, %c0_16] : memref<1x16xf32, #tpu.memory_space<vmem>>, vector<1x16xf32>
    %21 = vector.broadcast %20 : vector<1x16xf32> to vector<128x16xf32>
    %22 = arith.addf %19, %21 : vector<128x16xf32>
    %cst_17 = arith.constant 0.000000e+00 : f32
    %23 = vector.broadcast %cst_17 : f32 to vector<128x16xf32>
    %24 = arith.maximumf %22, %23 : vector<128x16xf32>
    %25 = arith.truncf %24 : vector<128x16xf32> to vector<128x16xbf16>
    %c0_18 = arith.constant 0 : index
    %c0_19 = arith.constant 0 : index
    %26 = vector.load %arg8[%c0_18, %c0_19] : memref<16x32xbf16, #tpu.memory_space<vmem>>, vector<16x32xbf16>
    %cst_20 = arith.constant dense<0.000000e+00> : vector<128x32xf32>
    %27 = tpu.matmul %25, %26, %cst_20 {dimension_numbers = #tpu.dot_dimension_numbers<[1], [0], [0], [1], [0, 0, 1, 1], [], []>} : vector<128x16xbf16>, vector<16x32xbf16>, vector<128x32xf32> -> vector<128x32xf32>
    %c0_21 = arith.constant 0 : index
    %c0_22 = arith.constant 0 : index
    %28 = vector.load %arg9[%c0_21, %c0_22] : memref<1x32xf32, #tpu.memory_space<vmem>>, vector<1x32xf32>
    %29 = vector.broadcast %28 : vector<1x32xf32> to vector<128x32xf32>
    %30 = arith.addf %27, %29 : vector<128x32xf32>
    %cst_23 = arith.constant 0.000000e+00 : f32
    %31 = vector.broadcast %cst_23 : f32 to vector<128x32xf32>
    %32 = arith.maximumf %30, %31 : vector<128x32xf32>
    %33 = arith.truncf %32 : vector<128x32xf32> to vector<128x32xbf16>
    %c0_24 = arith.constant 0 : index
    %c0_25 = arith.constant 0 : index
    %34 = vector.load %arg10[%c0_24, %c0_25] : memref<32x64xbf16, #tpu.memory_space<vmem>>, vector<32x64xbf16>
    %cst_26 = arith.constant dense<0.000000e+00> : vector<128x64xf32>
    %35 = tpu.matmul %33, %34, %cst_26 {dimension_numbers = #tpu.dot_dimension_numbers<[1], [0], [0], [1], [0, 0, 1, 1], [], []>} : vector<128x32xbf16>, vector<32x64xbf16>, vector<128x64xf32> -> vector<128x64xf32>
    %c0_27 = arith.constant 0 : index
    %c0_28 = arith.constant 0 : index
    %36 = vector.load %arg11[%c0_27, %c0_28] : memref<1x64xf32, #tpu.memory_space<vmem>>, vector<1x64xf32>
    %37 = vector.broadcast %36 : vector<1x64xf32> to vector<128x64xf32>
    %38 = arith.addf %35, %37 : vector<128x64xf32>
    %cst_29 = arith.constant 0.000000e+00 : f32
    %39 = vector.broadcast %cst_29 : f32 to vector<128x64xf32>
    %40 = arith.maximumf %38, %39 : vector<128x64xf32>
    %41 = arith.truncf %40 : vector<128x64xf32> to vector<128x64xbf16>
    %c0_30 = arith.constant 0 : index
    %c0_31 = arith.constant 0 : index
    %42 = vector.load %arg12[%c0_30, %c0_31] : memref<64x32xbf16, #tpu.memory_space<vmem>>, vector<64x32xbf16>
    %cst_32 = arith.constant dense<0.000000e+00> : vector<128x32xf32>
    %43 = tpu.matmul %41, %42, %cst_32 {dimension_numbers = #tpu.dot_dimension_numbers<[1], [0], [0], [1], [0, 0, 1, 1], [], []>} : vector<128x64xbf16>, vector<64x32xbf16>, vector<128x32xf32> -> vector<128x32xf32>
    %c0_33 = arith.constant 0 : index
    %c0_34 = arith.constant 0 : index
    %44 = vector.load %arg13[%c0_33, %c0_34] : memref<1x32xf32, #tpu.memory_space<vmem>>, vector<1x32xf32>
    %45 = vector.broadcast %44 : vector<1x32xf32> to vector<128x32xf32>
    %46 = arith.addf %43, %45 : vector<128x32xf32>
    %cst_35 = arith.constant 0.000000e+00 : f32
    %47 = vector.broadcast %cst_35 : f32 to vector<128x32xf32>
    %48 = arith.subf %47, %46 : vector<128x32xf32>
    %49 = math.exp %48 : vector<128x32xf32>
    %cst_36 = arith.constant 1.000000e+00 : f32
    %50 = vector.broadcast %cst_36 : f32 to vector<128x32xf32>
    %51 = arith.addf %50, %49 : vector<128x32xf32>
    %52 = tpu.reciprocal %51 {approx = true} : vector<128x32xf32> -> vector<128x32xf32>
    %c0_37 = arith.constant 0 : index
    %c0_38 = arith.constant 0 : index
    %53 = vector.load %arg14[%c0_37, %c0_38] : memref<128x32xf32, #tpu.memory_space<vmem>>, vector<128x32xf32>
    tpu.vector_store %arg14[%c0_37, %c0_38], %52 {strides = array<i32>} : memref<128x32xf32, #tpu.memory_space<vmem>>, vector<128x32xf32>,
    return
  }
  func.func @transform_0(%arg0: i32) -> (i32, i32) {
    %c0_i32 = arith.constant 0 : i32
    %c0_i32_0 = arith.constant 0 : i32
    return %arg0, %c0_i32 : i32, i32
  }
  func.func @transform_1(%arg0: i32) -> (i32, i32) {
    %c0_i32 = arith.constant 0 : i32
    %c0_i32_0 = arith.constant 0 : i32
    %c0_i32_1 = arith.constant 0 : i32
    return %c0_i32, %c0_i32_0 : i32, i32
  }
  func.func @transform_2(%arg0: i32) -> (i32, i32) {
    %c0_i32 = arith.constant 0 : i32
    %c0_i32_0 = arith.constant 0 : i32
    %c0_i32_1 = arith.constant 0 : i32
    return %c0_i32, %c0_i32_0 : i32, i32
  }
  func.func @transform_3(%arg0: i32) -> (i32, i32) {
    %c0_i32 = arith.constant 0 : i32
    %c0_i32_0 = arith.constant 0 : i32
    %c0_i32_1 = arith.constant 0 : i32
    return %c0_i32, %c0_i32_0 : i32, i32
  }
  func.func @transform_4(%arg0: i32) -> (i32, i32) {
    %c0_i32 = arith.constant 0 : i32
    %c0_i32_0 = arith.constant 0 : i32
    %c0_i32_1 = arith.constant 0 : i32
    return %c0_i32, %c0_i32_0 : i32, i32
  }
  func.func @transform_5(%arg0: i32) -> (i32, i32) {
    %c0_i32 = arith.constant 0 : i32
    %c0_i32_0 = arith.constant 0 : i32
    %c0_i32_1 = arith.constant 0 : i32
    return %c0_i32, %c0_i32_0 : i32, i32
  }
  func.func @transform_6(%arg0: i32) -> (i32, i32) {
    %c0_i32 = arith.constant 0 : i32
    %c0_i32_0 = arith.constant 0 : i32
    %c0_i32_1 = arith.constant 0 : i32
    return %c0_i32, %c0_i32_0 : i32, i32
  }
  func.func @transform_7(%arg0: i32) -> (i32, i32) {
    %c0_i32 = arith.constant 0 : i32
    %c0_i32_0 = arith.constant 0 : i32
    %c0_i32_1 = arith.constant 0 : i32
    return %c0_i32, %c0_i32_0 : i32, i32
  }
  func.func @transform_8(%arg0: i32) -> (i32, i32) {
    %c0_i32 = arith.constant 0 : i32
    %c0_i32_0 = arith.constant 0 : i32
    %c0_i32_1 = arith.constant 0 : i32
    return %c0_i32, %c0_i32_0 : i32, i32
  }
  func.func @transform_9(%arg0: i32) -> (i32, i32) {
    %c0_i32 = arith.constant 0 : i32
    %c0_i32_0 = arith.constant 0 : i32
    %c0_i32_1 = arith.constant 0 : i32
    return %c0_i32, %c0_i32_0 : i32, i32
  }
  func.func @transform_10(%arg0: i32) -> (i32, i32) {
    %c0_i32 = arith.constant 0 : i32
    %c0_i32_0 = arith.constant 0 : i32
    %c0_i32_1 = arith.constant 0 : i32
    return %c0_i32, %c0_i32_0 : i32, i32
  }
  func.func @transform_11(%arg0: i32) -> (i32, i32) {
    %c0_i32 = arith.constant 0 : i32
    %c0_i32_0 = arith.constant 0 : i32
    %c0_i32_1 = arith.constant 0 : i32
    return %c0_i32, %c0_i32_0 : i32, i32
  }
  func.func @transform_12(%arg0: i32) -> (i32, i32) {
    %c0_i32 = arith.constant 0 : i32
    %c0_i32_0 = arith.constant 0 : i32
    %c0_i32_1 = arith.constant 0 : i32
    return %c0_i32, %c0_i32_0 : i32, i32
  }
  func.func @transform_13(%arg0: i32) -> (i32, i32) {
    %c0_i32 = arith.constant 0 : i32
    %c0_i32_0 = arith.constant 0 : i32
    return %arg0, %c0_i32 : i32, i32
  }
}

</mosaic_0001>

<llo_original>
// kernel: _forward_impl.1
$region0: #{_forward_impl.1}
  #allocation0 [shape = 'u32[]', space=smem, size = 0x4, offset = 0x4, fixed_abs, tag = 'smem constant byte address 0x4 - core index']
  #allocation1 [shape = 'u32[144,128]{1,0:T(1,128)}', space=vmem, size = 0x12000, scoped, tag = 'internal scratch']
  %s0 = inlined_call_operand.vmem [shape: f32[256,32], index: 0, kind: input, shape index: {}]
  %s1 = inlined_call_operand.vmem [shape: bf16[32,64], index: 1, kind: input, shape index: {}]
  %s2 = inlined_call_operand.vmem [shape: f32[1,64], index: 2, kind: input, shape index: {}]
  %s3 = inlined_call_operand.vmem [shape: bf16[64,32], index: 3, kind: input, shape index: {}]
  %s4 = inlined_call_operand.vmem [shape: f32[1,32], index: 4, kind: input, shape index: {}]
  %s5 = inlined_call_operand.vmem [shape: bf16[32,16], index: 5, kind: input, shape index: {}]
  %s6 = inlined_call_operand.vmem [shape: f32[1,16], index: 6, kind: input, shape index: {}]
  %s7 = inlined_call_operand.vmem [shape: bf16[16,32], index: 7, kind: input, shape index: {}]
  %s8 = inlined_call_operand.vmem [shape: f32[1,32], index: 8, kind: input, shape index: {}]
  %s9 = inlined_call_operand.vmem [shape: bf16[32,64], index: 9, kind: input, shape index: {}]
  %s10 = inlined_call_operand.vmem [shape: f32[1,64], index: 10, kind: input, shape index: {}]
  %s11 = inlined_call_operand.vmem [shape: bf16[64,32], index: 11, kind: input, shape index: {}]
  %s12 = inlined_call_operand.vmem [shape: f32[1,32], index: 12, kind: input, shape index: {}]
  %s13 = inlined_call_operand.vmem [shape: f32[256,32], index: 13, kind: output, shape index: {}]
  %s14 = sld [smem:[#allocation0]]
  $region85: #{_forward_impl.1} parent=0
    _
  %s16 = ssub.s32 1, %s14
  %s17 = scalar_select 0, %s16, %s14
  loop: start=0, step=1, limit=4
  $region2: #{_forward_impl.1} parent=0 // loop_pre_header
    _
  $region3: #{_forward_impl.1} parent=0 // loop_header
    %s19 = sphi 0, %s23
    %p20 = scmp.ge.s32.totalorder %s19, 4
    %s29 = sphi 0, %s31
    %s32 = sphi 0, %s29
    %s33 = sphi 0, %s32
    %s49 = sphi 0, %s33
    %s53 = sphi 0, %s53
    %s55 = sphi 0, %s53
    %s56 = sphi 0, %s55
    %s70 = sphi 0, %s56
    %s74 = sphi 0, %s74
    %s76 = sphi 0, %s74
    %s77 = sphi 0, %s76
    %s91 = sphi 0, %s77
    %s95 = sphi 0, %s95
    %s97 = sphi 0, %s95
    %s98 = sphi 0, %s97
    %s112 = sphi 0, %s98
    %s116 = sphi 0, %s116
    %s118 = sphi 0, %s116
    %s119 = sphi 0, %s118
    %s133 = sphi 0, %s119
    %s137 = sphi 0, %s137
    %s139 = sphi 0, %s137
    %s140 = sphi 0, %s139
    %s154 = sphi 0, %s140
    %s158 = sphi 0, %s158
    %s160 = sphi 0, %s158
    %s161 = sphi 0, %s160
    %s175 = sphi 0, %s161
    %s179 = sphi 0, %s179
    %s181 = sphi 0, %s179
    %s182 = sphi 0, %s181
    %s196 = sphi 0, %s182
    %s200 = sphi 0, %s200
    %s202 = sphi 0, %s200
    %s203 = sphi 0, %s202
    %s217 = sphi 0, %s203
    %s221 = sphi 0, %s221
    %s223 = sphi 0, %s221
    %s224 = sphi 0, %s223
    %s238 = sphi 0, %s224
    %s242 = sphi 0, %s242
    %s244 = sphi 0, %s242
    %s245 = sphi 0, %s244
    %s259 = sphi 0, %s245
    %s263 = sphi 0, %s263
    %s265 = sphi 0, %s263
    %s266 = sphi 0, %s265
    %s280 = sphi 0, %s266
    %s284 = sphi 0, %s284
    %s286 = sphi 0, %s284
    %s287 = sphi 0, %s286
    %s301 = sphi 0, %s287
    %s307 = sphi 0, %s309
    %s310 = sphi 0, %s307
    %s311 = sphi 0, %s310
    %s327 = sphi 0, %s311
  $region4: #{_forward_impl.1} parent=0 // loop_header_branch
    %22 = sbr.rel (%p20) target = $region8
  $region5: #{_forward_impl.1} parent=0 // loop_body
    %s24 = ssub.s32 %s19, 1
    %s25 = ssub.s32 %s19, 2
    %s26 = sadd.s32 %s19, 1
    %s27 = ssub.s32 %s19, %s26
    %p28 = scmp.eq.s32.totalorder %s27, 0
    %s30 = sadd.s32 %s29, 1
    %s31 = scalar_select %p28, %s29, %s30
    %p34 = pneg %p28
    %p35 = scmp.eq.s32.totalorder %s19, 1
    %p36 = por %p34, %p35
    %p37 = scmp.ne.s32.totalorder %s29, %s32
    %p38 = scmp.eq.s32.totalorder %s19, 0
    %p39 = por %p37, %p38
    %p40 = scmp.ne.s32.totalorder %s29, %s32
    %p41 = scmp.eq.s32.totalorder %s24, 1
    %p42 = por %p40, %p41
    %p43 = scmp.ne.s32.totalorder %s32, %s33
    %p44 = scmp.eq.s32.totalorder %s24, 0
    %p45 = por %p43, %p44
    %p46 = scmp.ne.s32.totalorder %s32, %s33
    %p47 = scmp.eq.s32.totalorder %s25, 1
    %p48 = por %p46, %p47
    %p50 = scmp.ne.s32.totalorder %s33, %s49
    %p51 = scmp.eq.s32.totalorder %s25, 0
    %p52 = por %p50, %p51
    %s54 = sadd.s32 %s53, 1
    %p57 = scmp.eq.s32.totalorder %s19, 1
    %p58 = scmp.ne.s32.totalorder %s53, %s55
    %p59 = scmp.eq.s32.totalorder %s19, 0
    %p60 = por %p58, %p59
    %p61 = scmp.ne.s32.totalorder %s53, %s55
    %p62 = scmp.eq.s32.totalorder %s24, 1
    %p63 = por %p61, %p62
    %p64 = scmp.ne.s32.totalorder %s55, %s56
    %p65 = scmp.eq.s32.totalorder %s24, 0
    %p66 = por %p64, %p65
    %p67 = scmp.ne.s32.totalorder %s55, %s56
    %p68 = scmp.eq.s32.totalorder %s25, 1
    %p69 = por %p67, %p68
    %p71 = scmp.ne.s32.totalorder %s56, %s70
    %p72 = scmp.eq.s32.totalorder %s25, 0
    %p73 = por %p71, %p72
    %s75 = sadd.s32 %s74, 1
    %p78 = scmp.eq.s32.totalorder %s19, 1
    %p79 = scmp.ne.s32.totalorder %s74, %s76
    %p80 = scmp.eq.s32.totalorder %s19, 0
    %p81 = por %p79, %p80
    %p82 = scmp.ne.s32.totalorder %s74, %s76
    %p83 = scmp.eq.s32.totalorder %s24, 1
    %p84 = por %p82, %p83
    %p85 = scmp.ne.s32.totalorder %s76, %s77
    %p86 = scmp.eq.s32.totalorder %s24, 0
    %p87 = por %p85, %p86
    %p88 = scmp.ne.s32.totalorder %s76, %s77
    %p89 = scmp.eq.s32.totalorder %s25, 1
    %p90 = por %p88, %p89
    %p92 = scmp.ne.s32.totalorder %s77, %s91
    %p93 = scmp.eq.s32.totalorder %s25, 0
    %p94 = por %p92, %p93
    %s96 = sadd.s32 %s95, 1
    %p99 = scmp.eq.s32.totalorder %s19, 1
    %p100 = scmp.ne.s32.totalorder %s95, %s97
    %p101 = scmp.eq.s32.totalorder %s19, 0
    %p102 = por %p100, %p101
    %p103 = scmp.ne.s32.totalorder %s95, %s97
    %p104 = scmp.eq.s32.totalorder %s24, 1
    %p105 = por %p103, %p104
    %p106 = scmp.ne.s32.totalorder %s97, %s98
    %p107 = scmp.eq.s32.totalorder %s24, 0
    %p108 = por %p106, %p107
    %p109 = scmp.ne.s32.totalorder %s97, %s98
    %p110 = scmp.eq.s32.totalorder %s25, 1
    %p111 = por %p109, %p110
    %p113 = scmp.ne.s32.totalorder %s98, %s112
    %p114 = scmp.eq.s32.totalorder %s25, 0
    %p115 = por %p113, %p114
    %s117 = sadd.s32 %s116, 1
    %p120 = scmp.eq.s32.totalorder %s19, 1
    %p121 = scmp.ne.s32.totalorder %s116, %s118
    %p122 = scmp.eq.s32.totalorder %s19, 0
    %p123 = por %p121, %p122
    %p124 = scmp.ne.s32.totalorder %s116, %s118
    %p125 = scmp.eq.s32.totalorder %s24, 1
    %p126 = por %p124, %p125
    %p127 = scmp.ne.s32.totalorder %s118, %s119
    %p128 = scmp.eq.s32.totalorder %s24, 0
    %p129 = por %p127, %p128
    %p130 = scmp.ne.s32.totalorder %s118, %s119
    %p131 = scmp.eq.s32.totalorder %s25, 1
    %p132 = por %p130, %p131
    %p134 = scmp.ne.s32.totalorder %s119, %s133
    %p135 = scmp.eq.s32.totalorder %s25, 0
    %p136 = por %p134, %p135
    %s138 = sadd.s32 %s137, 1
    %p141 = scmp.eq.s32.totalorder %s19, 1
    %p142 = scmp.ne.s32.totalorder %s137, %s139
    %p143 = scmp.eq.s32.totalorder %s19, 0
    %p144 = por %p142, %p143
    %p145 = scmp.ne.s32.totalorder %s137, %s139
    %p146 = scmp.eq.s32.totalorder %s24, 1
    %p147 = por %p145, %p146
    %p148 = scmp.ne.s32.totalorder %s139, %s140
    %p149 = scmp.eq.s32.totalorder %s24, 0
    %p150 = por %p148, %p149
    %p151 = scmp.ne.s32.totalorder %s139, %s140
    %p152 = scmp.eq.s32.totalorder %s25, 1
    %p153 = por %p151, %p152
    %p155 = scmp.ne.s32.totalorder %s140, %s154
    %p156 = scmp.eq.s32.totalorder %s25, 0
    %p157 = por %p155, %p156
    %s159 = sadd.s32 %s158, 1
    %p162 = scmp.eq.s32.totalorder %s19, 1
    %p163 = scmp.ne.s32.totalorder %s158, %s160
    %p164 = scmp.eq.s32.totalorder %s19, 0
    %p165 = por %p163, %p164
    %p166 = scmp.ne.s32.totalorder %s158, %s160
    %p167 = scmp.eq.s32.totalorder %s24, 1
    %p168 = por %p166, %p167
    %p169 = scmp.ne.s32.totalorder %s160, %s161
    %p170 = scmp.eq.s32.totalorder %s24, 0
    %p171 = por %p169, %p170
    %p172 = scmp.ne.s32.totalorder %s160, %s161
    %p173 = scmp.eq.s32.totalorder %s25, 1
    %p174 = por %p172, %p173
    %p176 = scmp.ne.s32.totalorder %s161, %s175
    %p177 = scmp.eq.s32.totalorder %s25, 0
    %p178 = por %p176, %p177
    %s180 = sadd.s32 %s179, 1
    %p183 = scmp.eq.s32.totalorder %s19, 1
    %p184 = scmp.ne.s32.totalorder %s179, %s181
    %p185 = scmp.eq.s32.totalorder %s19, 0
    %p186 = por %p184, %p185
    %p187 = scmp.ne.s32.totalorder %s179, %s181
    %p188 = scmp.eq.s32.totalorder %s24, 1
    %p189 = por %p187, %p188
    %p190 = scmp.ne.s32.totalorder %s181, %s182
    %p191 = scmp.eq.s32.totalorder %s24, 0
    %p192 = por %p190, %p191
    %p193 = scmp.ne.s32.totalorder %s181, %s182
    %p194 = scmp.eq.s32.totalorder %s25, 1
    %p195 = por %p193, %p194
    %p197 = scmp.ne.s32.totalorder %s182, %s196
    %p198 = scmp.eq.s32.totalorder %s25, 0
    %p199 = por %p197, %p198
    %s201 = sadd.s32 %s200, 1
    %p204 = scmp.eq.s32.totalorder %s19, 1
    %p205 = scmp.ne.s32.totalorder %s200, %s202
    %p206 = scmp.eq.s32.totalorder %s19, 0
    %p207 = por %p205, %p206
    %p208 = scmp.ne.s32.totalorder %s200, %s202
    %p209 = scmp.eq.s32.totalorder %s24, 1
    %p210 = por %p208, %p209
    %p211 = scmp.ne.s32.totalorder %s202, %s203
    %p212 = scmp.eq.s32.totalorder %s24, 0
    %p213 = por %p211, %p212
    %p214 = scmp.ne.s32.totalorder %s202, %s203
    %p215 = scmp.eq.s32.totalorder %s25, 1
    %p216 = por %p214, %p215
    %p218 = scmp.ne.s32.totalorder %s203, %s217
    %p219 = scmp.eq.s32.totalorder %s25, 0
    %p220 = por %p218, %p219
    %s222 = sadd.s32 %s221, 1
    %p225 = scmp.eq.s32.totalorder %s19, 1
    %p226 = scmp.ne.s32.totalorder %s221, %s223
    %p227 = scmp.eq.s32.totalorder %s19, 0
    %p228 = por %p226, %p227
    %p229 = scmp.ne.s32.totalorder %s221, %s223
    %p230 = scmp.eq.s32.totalorder %s24, 1
    %p231 = por %p229, %p230
    %p232 = scmp.ne.s32.totalorder %s223, %s224
    %p233 = scmp.eq.s32.totalorder %s24, 0
    %p234 = por %p232, %p233
    %p235 = scmp.ne.s32.totalorder %s223, %s224
    %p236 = scmp.eq.s32.totalorder %s25, 1
    %p237 = por %p235, %p236
    %p239 = scmp.ne.s32.totalorder %s224, %s238
    %p240 = scmp.eq.s32.totalorder %s25, 0
    %p241 = por %p239, %p240
    %s243 = sadd.s32 %s242, 1
    %p246 = scmp.eq.s32.totalorder %s19, 1
    %p247 = scmp.ne.s32.totalorder %s242, %s244
    %p248 = scmp.eq.s32.totalorder %s19, 0
    %p249 = por %p247, %p248
    %p250 = scmp.ne.s32.totalorder %s242, %s244
    %p251 = scmp.eq.s32.totalorder %s24, 1
    %p252 = por %p250, %p251
    %p253 = scmp.ne.s32.totalorder %s244, %s245
    %p254 = scmp.eq.s32.totalorder %s24, 0
    %p255 = por %p253, %p254
    %p256 = scmp.ne.s32.totalorder %s244, %s245
    %p257 = scmp.eq.s32.totalorder %s25, 1
    %p258 = por %p256, %p257
    %p260 = scmp.ne.s32.totalorder %s245, %s259
    %p261 = scmp.eq.s32.totalorder %s25, 0
    %p262 = por %p260, %p261
    %s264 = sadd.s32 %s263, 1
    %p267 = scmp.eq.s32.totalorder %s19, 1
    %p268 = scmp.ne.s32.totalorder %s263, %s265
    %p269 = scmp.eq.s32.totalorder %s19, 0
    %p270 = por %p268, %p269
    %p271 = scmp.ne.s32.totalorder %s263, %s265
    %p272 = scmp.eq.s32.totalorder %s24, 1
    %p273 = por %p271, %p272
    %p274 = scmp.ne.s32.totalorder %s265, %s266
    %p275 = scmp.eq.s32.totalorder %s24, 0
    %p276 = por %p274, %p275
    %p277 = scmp.ne.s32.totalorder %s265, %s266
    %p278 = scmp.eq.s32.totalorder %s25, 1
    %p279 = por %p277, %p278
    %p281 = scmp.ne.s32.totalorder %s266, %s280
    %p282 = scmp.eq.s32.totalorder %s25, 0
    %p283 = por %p281, %p282
    %s285 = sadd.s32 %s284, 1
    %p288 = scmp.eq.s32.totalorder %s19, 1
    %p289 = scmp.ne.s32.totalorder %s284, %s286
    %p290 = scmp.eq.s32.totalorder %s19, 0
    %p291 = por %p289, %p290
    %p292 = scmp.ne.s32.totalorder %s284, %s286
    %p293 = scmp.eq.s32.totalorder %s24, 1
    %p294 = por %p292, %p293
    %p295 = scmp.ne.s32.totalorder %s286, %s287
    %p296 = scmp.eq.s32.totalorder %s24, 0
    %p297 = por %p295, %p296
    %p298 = scmp.ne.s32.totalorder %s286, %s287
    %p299 = scmp.eq.s32.totalorder %s25, 1
    %p300 = por %p298, %p299
    %p302 = scmp.ne.s32.totalorder %s287, %s301
    %p303 = scmp.eq.s32.totalorder %s25, 0
    %p304 = por %p302, %p303
    %s305 = ssub.s32 %s19, %s26
    %p306 = scmp.eq.s32.totalorder %s305, 0
    %s308 = sadd.s32 %s307, 1
    %s309 = scalar_select %p306, %s307, %s308
    %p312 = pneg %p306
    %p313 = scmp.eq.s32.totalorder %s19, 1
    %p314 = por %p312, %p313
    %p315 = scmp.ne.s32.totalorder %s307, %s310
    %p316 = scmp.eq.s32.totalorder %s19, 0
    %p317 = por %p315, %p316
    %p318 = scmp.ne.s32.totalorder %s307, %s310
    %p319 = scmp.eq.s32.totalorder %s24, 1
    %p320 = por %p318, %p319
    %p321 = scmp.ne.s32.totalorder %s310, %s311
    %p322 = scmp.eq.s32.totalorder %s24, 0
    %p323 = por %p321, %p322
    %p324 = scmp.ne.s32.totalorder %s310, %s311
    %p325 = scmp.eq.s32.totalorder %s25, 1
    %p326 = por %p324, %p325
    %p328 = scmp.ne.s32.totalorder %s311, %s327
    %p329 = scmp.eq.s32.totalorder %s25, 0
    %p330 = por %p328, %p329
    %p331 = scmp.le.s32.totalorder 1, %s19
    %p332 = scmp.lt.s32.totalorder %s19, 3
    %p333 = pnand %p331, %p332
    %p334 = pneg %p333
    // Predicated region
    $region9: #{_forward_impl.1} parent=5 // pred_check
      _
    $region10: #{_forward_impl.1} parent=5 // pred_check_branch
      %336 = sbr.rel (%p333) target = $region12
    $region11: #{_forward_impl.1} parent=5 // pred_region
      %s337 = ssub.s32 %s19, 1
      // Predicated region
      $region13: #{_forward_impl.1} parent=11 // pred_check
        %p338 = pneg %p66
      $region14: #{_forward_impl.1} parent=11 // pred_check_branch
        %340 = sbr.rel (%p338) target = $region16
      $region15: #{_forward_impl.1} parent=11 // pred_region
        _
      $region16: #{_forward_impl.1} parent=11 // pred_fallthru
        _
      // Predicated region
      $region17: #{_forward_impl.1} parent=11 // pred_check
        %p341 = pneg %p87
      $region18: #{_forward_impl.1} parent=11 // pred_check_branch
        %343 = sbr.rel (%p341) target = $region20
      $region19: #{_forward_impl.1} parent=11 // pred_region
        _
      $region20: #{_forward_impl.1} parent=11 // pred_fallthru
        _
      // Predicated region
      $region21: #{_forward_impl.1} parent=11 // pred_check
        %p344 = pneg %p108
      $region22: #{_forward_impl.1} parent=11 // pred_check_branch
        %346 = sbr.rel (%p344) target = $region24
      $region23: #{_forward_impl.1} parent=11 // pred_region
        _
      $region24: #{_forward_impl.1} parent=11 // pred_fallthru
        _
      // Predicated region
      $region25: #{_forward_impl.1} parent=11 // pred_check
        %p347 = pneg %p129
      $region26: #{_forward_impl.1} parent=11 // pred_check_branch
        %349 = sbr.rel (%p347) target = $region28
      $region27: #{_forward_impl.1} parent=11 // pred_region
        _
      $region28: #{_forward_impl.1} parent=11 // pred_fallthru
        _
      // Predicated region
      $region29: #{_forward_impl.1} parent=11 // pred_check
        %p350 = pneg %p150
      $region30: #{_forward_impl.1} parent=11 // pred_check_branch
        %352 = sbr.rel (%p350) target = $region32
      $region31: #{_forward_impl.1} parent=11 // pred_region
        _
      $region32: #{_forward_impl.1} parent=11 // pred_fallthru
        _
      // Predicated region
      $region33: #{_forward_impl.1} parent=11 // pred_check
        %p353 = pneg %p171
      $region34: #{_forward_impl.1} parent=11 // pred_check_branch
        %355 = sbr.rel (%p353) target = $region36
      $region35: #{_forward_impl.1} parent=11 // pred_region
        _
      $region36: #{_forward_impl.1} parent=11 // pred_fallthru
        _
      // Predicated region
      $region37: #{_forward_impl.1} parent=11 // pred_check
        %p356 = pneg %p192
      $region38: #{_forward_impl.1} parent=11 // pred_check_branch
        %358 = sbr.rel (%p356) target = $region40
      $region39: #{_forward_impl.1} parent=11 // pred_region
        _
      $region40: #{_forward_impl.1} parent=11 // pred_fallthru
        _
      // Predicated region
      $region41: #{_forward_impl.1} parent=11 // pred_check
        %p359 = pneg %p213
      $region42: #{_forward_impl.1} parent=11 // pred_check_branch
        %361 = sbr.rel (%p359) target = $region44
      $region43: #{_forward_impl.1} parent=11 // pred_region
        _
      $region44: #{_forward_impl.1} parent=11 // pred_fallthru
        _
      // Predicated region
      $region45: #{_forward_impl.1} parent=11 // pred_check
        %p362 = pneg %p234
      $region46: #{_forward_impl.1} parent=11 // pred_check_branch
        %364 = sbr.rel (%p362) target = $region48
      $region47: #{_forward_impl.1} parent=11 // pred_region
        _
      $region48: #{_forward_impl.1} parent=11 // pred_fallthru
        _
      // Predicated region
      $region49: #{_forward_impl.1} parent=11 // pred_check
        %p365 = pneg %p255
      $region50: #{_forward_impl.1} parent=11 // pred_check_branch
        %367 = sbr.rel (%p365) target = $region52
      $region51: #{_forward_impl.1} parent=11 // pred_region
        _
      $region52: #{_forward_impl.1} parent=11 // pred_fallthru
        _
      // Predicated region
      $region53: #{_forward_impl.1} parent=11 // pred_check
        %p368 = pneg %p276
      $region54: #{_forward_impl.1} parent=11 // pred_check_branch
        %370 = sbr.rel (%p368) target = $region56
      $region55: #{_forward_impl.1} parent=11 // pred_region
        _
      $region56: #{_forward_impl.1} parent=11 // pred_fallthru
        _
      // Predicated region
      $region57: #{_forward_impl.1} parent=11 // pred_check
        %p371 = pneg %p297
      $region58: #{_forward_impl.1} parent=11 // pred_check_branch
        %373 = sbr.rel (%p371) target = $region60
      $region59: #{_forward_impl.1} parent=11 // pred_region
        _
      $region60: #{_forward_impl.1} parent=11 // pred_fallthru
        _
    $region12: #{_forward_impl.1} parent=5 // pred_fallthru
      _
    %p374 = scmp.lt.s32.totalorder %s19, 2
    // Predicated region
    $region61: #{_forward_impl.1} parent=5 // pred_check
      %p375 = pneg %p374
    $region62: #{_forward_impl.1} parent=5 // pred_check_branch
      %377 = sbr.rel (%p375) target = $region64
    $region63: #{_forward_impl.1} parent=5 // pred_region
      // Predicated region
      $region65: #{_forward_impl.1} parent=63 // pred_check
        %p378 = pneg %p39
      $region66: #{_forward_impl.1} parent=63 // pred_check_branch
        %380 = sbr.rel (%p378) target = $region68
      $region67: #{_forward_impl.1} parent=63 // pred_region
        %s381 = smul.u32 16, %s19
        %p382 = scmp.lt.s32.totalorder %s381, 31
        %s383 = scalar_select %p382, %s381, 31
        %s384 = smul.addr %s383, 8
        %s385 = scalar_lea.vmem %s0, %s384
        %s386 = smul.u32 16, %s19
      $region68: #{_forward_impl.1} parent=63 // pred_fallthru
        _
    $region64: #{_forward_impl.1} parent=5 // pred_fallthru
      _
    %p387 = scmp.le.s32.totalorder 1, %s19
    %p388 = scmp.lt.s32.totalorder %s19, 3
    %p389 = pnand %p387, %p388
    %p390 = pneg %p389
    // Predicated region
    $region69: #{_forward_impl.1} parent=5 // pred_check
      _
    $region70: #{_forward_impl.1} parent=5 // pred_check_branch
      %392 = sbr.rel (%p389) target = $region72
    $region71: #{_forward_impl.1} parent=5 // pred_region
      %s393 = ssub.s32 %s19, 1
      %s394 = smul.u32 16, %s24
      %p395 = scmp.lt.s32.totalorder %s394, 31
      %s396 = scalar_select %p395, %s394, 31
      %s397 = smul.addr %s396, 8
      %s398 = scalar_lea.vmem %s0, %s397
      %p399 = pneg %p45
      %p400 = pneg %p42
      %p401 = pneg %p66
      %p402 = pneg %p63
      %p403 = pneg %p87
      %p404 = pneg %p84
      %p405 = pneg %p108
      %p406 = pneg %p105
      %p407 = pneg %p129
      %p408 = pneg %p126
      %p409 = pneg %p150
      %p410 = pneg %p147
      %p411 = pneg %p171
      %p412 = pneg %p168
      %p413 = pneg %p192
      %p414 = pneg %p189
      %p415 = pneg %p213
      %p416 = pneg %p210
      %p417 = pneg %p234
      %p418 = pneg %p231
      %p419 = pneg %p255
      %p420 = pneg %p252
      %p421 = pneg %p276
      %p422 = pneg %p273
      %p423 = pneg %p297
      %p424 = pneg %p294
      %p425 = pneg %p323
      %p426 = pneg %p320
      %s427 = smul.u32 16, %s24
      %p428 = scmp.lt.s32.totalorder %s427, 31
      %s429 = scalar_select %p428, %s427, 31
      %s430 = smul.addr %s429, 8
      %s431 = scalar_lea.vmem %s13, %s430
      %s432 = smul.u32 16, %s24
      %p433 = scmp.lt.s32.totalorder %s432, 31
      %s434 = scalar_select %p433, %s432, 31
      %s435 = smul.addr %s434, 8
      %s436 = scalar_lea.vmem %s0, %s435
      %s437 = smul.u32 16, %s24
      %s438 = smul.u32 16, %s24
      %p439 = scmp.lt.s32.totalorder %s438, 31
      %s440 = scalar_select %p439, %s438, 31
      %s441 = smul.addr %s440, 8
      %s442 = scalar_lea.vmem %s13, %s441
      %s443 = smul.u32 16, %s24
      %v445 = vld [vmem:[%s436] sm:$0xff]
      %v446 = vld [vmem:[%s436 + $0x8] sm:$0xff]
      %v447 = vld [vmem:[%s436 + $0x10] sm:$0xff]
      %v448 = vld [vmem:[%s436 + $0x18] sm:$0xff]
      %v449 = vld [vmem:[%s436 + $0x20] sm:$0xff]
      %v450 = vld [vmem:[%s436 + $0x28] sm:$0xff]
      %v451 = vld [vmem:[%s436 + $0x30] sm:$0xff]
      %v452 = vld [vmem:[%s436 + $0x38] sm:$0xff]
      %v453 = vld [vmem:[%s436 + $0x40] sm:$0xff]
      %v454 = vld [vmem:[%s436 + $0x48] sm:$0xff]
      %v455 = vld [vmem:[%s436 + $0x50] sm:$0xff]
      %v456 = vld [vmem:[%s436 + $0x58] sm:$0xff]
      %v457 = vld [vmem:[%s436 + $0x60] sm:$0xff]
      %v458 = vld [vmem:[%s436 + $0x68] sm:$0xff]
      %v459 = vld [vmem:[%s436 + $0x70] sm:$0xff]
      %v460 = vld [vmem:[%s436 + $0x78] sm:$0xff]
      %v461 = vpack.c.bf16 %v446, %v445
      %v462 = vpack.c.bf16 %v448, %v447
      %v463 = vpack.c.bf16 %v450, %v449
      %v464 = vpack.c.bf16 %v452, %v451
      %v465 = vpack.c.bf16 %v454, %v453
      %v466 = vpack.c.bf16 %v456, %v455
      %v467 = vpack.c.bf16 %v458, %v457
      %v468 = vpack.c.bf16 %v460, %v459
      %v469 = vld [vmem:[%s1] sm:$0xf]
      %v470 = vld [vmem:[%s1 + $0x4] sm:$0xf]
      %v471 = vld [vmem:[%s1 + $0x8] sm:$0xf]
      %v472 = vld [vmem:[%s1 + $0xc] sm:$0xf]
      %v473 = vld [vmem:[%s2] sm:$0x1]
      %v475 = vlaneseq
      %v476 = vshrl.u32 %v475, 7
      %v477 = vsub.s32 0, %v476
      %v478 = vrot.slane %v473, %v477
      %v484 = vunpack.c.l.b16 %v469
      %v485 = vunpack.c.l.b16 %v470
      %v486 = vunpack.c.l.b16 %v471
      %v487 = vunpack.c.l.b16 %v472
      %v488 = vpack.c.b16 %v485, %v484
      %v489 = vpack.c.b16 %v487, %v486
      %vm492 = vcmask 261120
      %v494 = vsel %vm492, %v461, 0
      %v497 = vsel %vm492, %v462, 0
      %v500 = vsel %vm492, %v463, 0
      %v503 = vsel %vm492, %v464, 0
      %v506 = vsel %vm492, %v465, 0
      %v509 = vsel %vm492, %v466, 0
      %v512 = vsel %vm492, %v467, 0
      %v515 = vsel %vm492, %v468, 0
      %517 = vmatprep.subr.bf16.mxu0 0
      %518 = vmatpush1.bf16.msra.mxu0 %v488
      %519 = vmatprep.subr.bf16.mxu0 0
      %520 = vmatpush1.bf16.msra.mxu0 %v489
      %521 = vmatprep.subr.bf16.mxu0 0
      %522 = vmatpush1.bf16.msra.mxu0 0
      %523 = vmatprep.subr.bf16.mxu0 0
      %524 = vmatpush1.bf16.msra.mxu0 0
      %525 = vmatprep.subr.bf16.mxu0 0
      %526 = vmatpush1.bf16.msra.mxu0 0
      %527 = vmatprep.subr.bf16.mxu0 0
      %528 = vmatpush1.bf16.msra.mxu0 0
      %529 = vmatprep.subr.bf16.mxu0 0
      %530 = vmatpush1.bf16.msra.mxu0 0
      %531 = vmatprep.subr.bf16.mxu0 0
      %532 = vmatpush1.bf16.msra.mxu0 0
      %533 = vmatprep.subr.bf16.mxu0 0
      %534 = vmatpush1.bf16.msra.mxu0 0
      %535 = vmatprep.subr.bf16.mxu0 0
      %536 = vmatpush1.bf16.msra.mxu0 0
      %537 = vmatprep.subr.bf16.mxu0 0
      %538 = vmatpush1.bf16.msra.mxu0 0
      %539 = vmatprep.subr.bf16.mxu0 0
      %540 = vmatpush1.bf16.msra.mxu0 0
      %541 = vmatprep.subr.bf16.mxu0 0
      %542 = vmatpush1.bf16.msra.mxu0 0
      %543 = vmatprep.subr.bf16.mxu0 0
      %544 = vmatpush1.bf16.msra.mxu0 0
      %545 = vmatprep.subr.bf16.mxu0 0
      %546 = vmatpush1.bf16.msra.mxu0 0
      %547 = vmatprep.subr.bf16.mxu0 0
      %548 = vmatpush1.bf16.msra.mxu0 0
      %549 = vmatprep.mubr.bf16.mxu0 0
      %550 = vmatmul.mubr.bf16.gmra.mrb[0].mxu0 %v494
      %v551 = vpop.f32.mrb[0].mxu0
      %v552 = vadd.f32 %v478, %v551
      %v553 = vpop.f32.mrb[0].mxu0
      %v554 = vpop.f32.mrb[0].mxu0
      %v555 = vadd.f32 %v478, %v554
      %v556 = vpop.f32.mrb[0].mxu0
      %557 = vmatprep.mubr.bf16.mxu0 0
      %558 = vmatmul.mubr.bf16.gmra.mrb[0].mxu0 %v497
      %v559 = vpop.f32.mrb[0].mxu0
      %v560 = vadd.f32 %v478, %v559
      %v561 = vpop.f32.mrb[0].mxu0
      %v562 = vpop.f32.mrb[0].mxu0
      %v563 = vadd.f32 %v478, %v562
      %v564 = vpop.f32.mrb[0].mxu0
      %565 = vmatprep.mubr.bf16.mxu0 0
      %566 = vmatmul.mubr.bf16.gmra.mrb[0].mxu0 %v500
      %v567 = vpop.f32.mrb[0].mxu0
      %v568 = vadd.f32 %v478, %v567
      %v569 = vpop.f32.mrb[0].mxu0
      %v570 = vpop.f32.mrb[0].mxu0
      %v571 = vadd.f32 %v478, %v570
      %v572 = vpop.f32.mrb[0].mxu0
      %573 = vmatprep.mubr.bf16.mxu0 0
      %574 = vmatmul.mubr.bf16.gmra.mrb[0].mxu0 %v503
      %v575 = vpop.f32.mrb[0].mxu0
      %v576 = vadd.f32 %v478, %v575
      %v577 = vpop.f32.mrb[0].mxu0
      %v578 = vpop.f32.mrb[0].mxu0
      %v579 = vadd.f32 %v478, %v578
      %v580 = vpop.f32.mrb[0].mxu0
      %581 = vmatprep.mubr.bf16.mxu0 0
      %582 = vmatmul.mubr.bf16.gmra.mrb[0].mxu0 %v506
      %v583 = vpop.f32.mrb[0].mxu0
      %v584 = vadd.f32 %v478, %v583
      %v585 = vpop.f32.mrb[0].mxu0
      %v586 = vpop.f32.mrb[0].mxu0
      %v587 = vadd.f32 %v478, %v586
      %v588 = vpop.f32.mrb[0].mxu0
      %589 = vmatprep.mubr.bf16.mxu0 0
      %590 = vmatmul.mubr.bf16.gmra.mrb[0].mxu0 %v509
      %v591 = vpop.f32.mrb[0].mxu0
      %v592 = vadd.f32 %v478, %v591
      %v593 = vpop.f32.mrb[0].mxu0
      %v594 = vpop.f32.mrb[0].mxu0
      %v595 = vadd.f32 %v478, %v594
      %v596 = vpop.f32.mrb[0].mxu0
      %597 = vmatprep.mubr.bf16.mxu0 0
      %598 = vmatmul.mubr.bf16.gmra.mrb[0].mxu0 %v512
      %v599 = vpop.f32.mrb[0].mxu0
      %v600 = vadd.f32 %v478, %v599
      %v601 = vpop.f32.mrb[0].mxu0
      %v602 = vpop.f32.mrb[0].mxu0
      %v603 = vadd.f32 %v478, %v602
      %v604 = vpop.f32.mrb[0].mxu0
      %605 = vmatprep.mubr.bf16.mxu0 0
      %606 = vmatmul.mubr.bf16.gmra.mrb[0].mxu0 %v515
      %v607 = vpop.f32.mrb[0].mxu0
      %v608 = vadd.f32 %v478, %v607
      %v609 = vpop.f32.mrb[0].mxu0
      %v610 = vpop.f32.mrb[0].mxu0
      %v611 = vadd.f32 %v478, %v610
      %v612 = vpop.f32.mrb[0].mxu0
      %613 = vdwg.mxu0
      %v614 = vmax.f32 %v552, 0.0
      %v615 = vmax.f32 %v555, 0.0
      %v616 = vmax.f32 %v560, 0.0
      %v617 = vmax.f32 %v563, 0.0
      %v618 = vmax.f32 %v568, 0.0
      %v619 = vmax.f32 %v571, 0.0
      %v620 = vmax.f32 %v576, 0.0
      %v621 = vmax.f32 %v579, 0.0
      %v622 = vmax.f32 %v584, 0.0
      %v623 = vmax.f32 %v587, 0.0
      %v624 = vmax.f32 %v592, 0.0
      %v625 = vmax.f32 %v595, 0.0
      %v626 = vmax.f32 %v600, 0.0
      %v627 = vmax.f32 %v603, 0.0
      %v628 = vmax.f32 %v608, 0.0
      %v629 = vmax.f32 %v611, 0.0
      %v630 = vpack.c.bf16 %v615, %v614
      %v631 = vpack.c.bf16 %v617, %v616
      %v632 = vpack.c.bf16 %v619, %v618
      %v633 = vpack.c.bf16 %v621, %v620
      %v634 = vpack.c.bf16 %v623, %v622
      %v635 = vpack.c.bf16 %v625, %v624
      %v636 = vpack.c.bf16 %v627, %v626
      %v637 = vpack.c.bf16 %v629, %v628
      %v638 = vld [vmem:[%s3] sm:$0xf]
      %v639 = vld [vmem:[%s3 + $0x4] sm:$0xf]
      %v640 = vld [vmem:[%s3 + $0x8] sm:$0xf]
      %v641 = vld [vmem:[%s3 + $0xc] sm:$0xf]
      %v642 = vld [vmem:[%s3 + $0x10] sm:$0xf]
      %v643 = vld [vmem:[%s3 + $0x14] sm:$0xf]
      %v644 = vld [vmem:[%s3 + $0x18] sm:$0xf]
      %v645 = vld [vmem:[%s3 + $0x1c] sm:$0xf]
      %v646 = vld [vmem:[%s4] sm:$0x1]
      %v648 = vlaneseq
      %v649 = vshrl.u32 %v648, 7
      %v650 = vsub.s32 0, %v649
      %v651 = vrot.slane %v646, %v650
      %v661 = vunpack.c.l.b16 %v638
      %v662 = vunpack.c.l.b16 %v639
      %v663 = vunpack.c.l.b16 %v640
      %v664 = vunpack.c.l.b16 %v641
      %v665 = vunpack.c.l.b16 %v642
      %v666 = vunpack.c.l.b16 %v643
      %v667 = vunpack.c.l.b16 %v644
      %v668 = vunpack.c.l.b16 %v645
      %v669 = vpack.c.b16 %v662, %v661
      %v670 = vpack.c.b16 %v664, %v663
      %v671 = vpack.c.b16 %v666, %v665
      %v672 = vpack.c.b16 %v668, %v667
      %vm677 = vcmask 523264
      %v679 = vsel %vm677, %v630, 0
      %v682 = vsel %vm677, %v631, 0
      %v685 = vsel %vm677, %v632, 0
      %v688 = vsel %vm677, %v633, 0
      %v691 = vsel %vm677, %v634, 0
      %v694 = vsel %vm677, %v635, 0
      %v697 = vsel %vm677, %v636, 0
      %v700 = vsel %vm677, %v637, 0
      %702 = vmatprep.subr.bf16.mxu0 0
      %703 = vmatpush1.bf16.msra.mxu0 %v669
      %704 = vmatprep.subr.bf16.mxu0 0
      %705 = vmatpush1.bf16.msra.mxu0 %v670
      %706 = vmatprep.subr.bf16.mxu0 0
      %707 = vmatpush1.bf16.msra.mxu0 %v671
      %708 = vmatprep.subr.bf16.mxu0 0
      %709 = vmatpush1.bf16.msra.mxu0 %v672
      %710 = vmatprep.subr.bf16.mxu0 0
      %711 = vmatpush1.bf16.msra.mxu0 0
      %712 = vmatprep.subr.bf16.mxu0 0
      %713 = vmatpush1.bf16.msra.mxu0 0
      %714 = vmatprep.subr.bf16.mxu0 0
      %715 = vmatpush1.bf16.msra.mxu0 0
      %716 = vmatprep.subr.bf16.mxu0 0
      %717 = vmatpush1.bf16.msra.mxu0 0
      %718 = vmatprep.subr.bf16.mxu0 0
      %719 = vmatpush1.bf16.msra.mxu0 0
      %720 = vmatprep.subr.bf16.mxu0 0
      %721 = vmatpush1.bf16.msra.mxu0 0
      %722 = vmatprep.subr.bf16.mxu0 0
      %723 = vmatpush1.bf16.msra.mxu0 0
      %724 = vmatprep.subr.bf16.mxu0 0
      %725 = vmatpush1.bf16.msra.mxu0 0
      %726 = vmatprep.subr.bf16.mxu0 0
      %727 = vmatpush1.bf16.msra.mxu0 0
      %728 = vmatprep.subr.bf16.mxu0 0
      %729 = vmatpush1.bf16.msra.mxu0 0
      %730 = vmatprep.subr.bf16.mxu0 0
      %731 = vmatpush1.bf16.msra.mxu0 0
      %732 = vmatprep.subr.bf16.mxu0 0
      %733 = vmatpush1.bf16.msra.mxu0 0
      %734 = vmatprep.mubr.bf16.mxu0 0
      %735 = vmatmul.mubr.bf16.gmra.mrb[0].mxu0 %v679
      %v736 = vpop.f32.mrb[0].mxu0
      %v737 = vadd.f32 %v651, %v736
      %v738 = vpop.f32.mrb[0].mxu0
      %v739 = vpop.f32.mrb[0].mxu0
      %v740 = vadd.f32 %v651, %v739
      %v741 = vpop.f32.mrb[0].mxu0
      %742 = vmatprep.mubr.bf16.mxu0 0
      %743 = vmatmul.mubr.bf16.gmra.mrb[0].mxu0 %v682
      %v744 = vpop.f32.mrb[0].mxu0
      %v745 = vadd.f32 %v651, %v744
      %v746 = vpop.f32.mrb[0].mxu0
      %v747 = vpop.f32.mrb[0].mxu0
      %v748 = vadd.f32 %v651, %v747
      %v749 = vpop.f32.mrb[0].mxu0
      %750 = vmatprep.mubr.bf16.mxu0 0
      %751 = vmatmul.mubr.bf16.gmra.mrb[0].mxu0 %v685
      %v752 = vpop.f32.mrb[0].mxu0
      %v753 = vadd.f32 %v651, %v752
      %v754 = vpop.f32.mrb[0].mxu0
      %v755 = vpop.f32.mrb[0].mxu0
      %v756 = vadd.f32 %v651, %v755
      %v757 = vpop.f32.mrb[0].mxu0
      %758 = vmatprep.mubr.bf16.mxu0 0
      %759 = vmatmul.mubr.bf16.gmra.mrb[0].mxu0 %v688
      %v760 = vpop.f32.mrb[0].mxu0
      %v761 = vadd.f32 %v651, %v760
      %v762 = vpop.f32.mrb[0].mxu0
      %v763 = vpop.f32.mrb[0].mxu0
      %v764 = vadd.f32 %v651, %v763
      %v765 = vpop.f32.mrb[0].mxu0
      %766 = vmatprep.mubr.bf16.mxu0 0
      %767 = vmatmul.mubr.bf16.gmra.mrb[0].mxu0 %v691
      %v768 = vpop.f32.mrb[0].mxu0
      %v769 = vadd.f32 %v651, %v768
      %v770 = vpop.f32.mrb[0].mxu0
      %v771 = vpop.f32.mrb[0].mxu0
      %v772 = vadd.f32 %v651, %v771
      %v773 = vpop.f32.mrb[0].mxu0
      %774 = vmatprep.mubr.bf16.mxu0 0
      %775 = vmatmul.mubr.bf16.gmra.mrb[0].mxu0 %v694
      %v776 = vpop.f32.mrb[0].mxu0
      %v777 = vadd.f32 %v651, %v776
      %v778 = vpop.f32.mrb[0].mxu0
      %v779 = vpop.f32.mrb[0].mxu0
      %v780 = vadd.f32 %v651, %v779
      %v781 = vpop.f32.mrb[0].mxu0
      %782 = vmatprep.mubr.bf16.mxu0 0
      %783 = vmatmul.mubr.bf16.gmra.mrb[0].mxu0 %v697
      %v784 = vpop.f32.mrb[0].mxu0
      %v785 = vadd.f32 %v651, %v784
      %v786 = vpop.f32.mrb[0].mxu0
      %v787 = vpop.f32.mrb[0].mxu0
      %v788 = vadd.f32 %v651, %v787
      %v789 = vpop.f32.mrb[0].mxu0
      %790 = vmatprep.mubr.bf16.mxu0 0
      %791 = vmatmul.mubr.bf16.gmra.mrb[0].mxu0 %v700
      %v792 = vpop.f32.mrb[0].mxu0
      %v793 = vadd.f32 %v651, %v792
      %v794 = vpop.f32.mrb[0].mxu0
      %v795 = vpop.f32.mrb[0].mxu0
      %v796 = vadd.f32 %v651, %v795
      %v797 = vpop.f32.mrb[0].mxu0
      %798 = vdwg.mxu0
      %v799 = vmax.f32 %v737, 0.0
      %v800 = vmax.f32 %v740, 0.0
      %v801 = vmax.f32 %v745, 0.0
      %v802 = vmax.f32 %v748, 0.0
      %v803 = vmax.f32 %v753, 0.0
      %v804 = vmax.f32 %v756, 0.0
      %v805 = vmax.f32 %v761, 0.0
      %v806 = vmax.f32 %v764, 0.0
      %v807 = vmax.f32 %v769, 0.0
      %v808 = vmax.f32 %v772, 0.0
      %v809 = vmax.f32 %v777, 0.0
      %v810 = vmax.f32 %v780, 0.0
      %v811 = vmax.f32 %v785, 0.0
      %v812 = vmax.f32 %v788, 0.0
      %v813 = vmax.f32 %v793, 0.0
      %v814 = vmax.f32 %v796, 0.0
      %v815 = vpack.c.bf16 %v800, %v799
      %v816 = vpack.c.bf16 %v802, %v801
      %v817 = vpack.c.bf16 %v804, %v803
      %v818 = vpack.c.bf16 %v806, %v805
      %v819 = vpack.c.bf16 %v808, %v807
      %v820 = vpack.c.bf16 %v810, %v809
      %v821 = vpack.c.bf16 %v812, %v811
      %v822 = vpack.c.bf16 %v814, %v813
      %v823 = vld [vmem:[%s5] sm:$0xf]
      %v824 = vld [vmem:[%s5 + $0x4] sm:$0xf]
      %v825 = vld [vmem:[%s5 + $0x8] sm:$0xf]
      %v826 = vld [vmem:[%s5 + $0xc] sm:$0xf]
      %v827 = vld [vmem:[%s6] sm:$0x1]
      %v829 = vlaneseq
      %v830 = vshrl.u32 %v829, 7
      %v831 = vsub.s32 0, %v830
      %v832 = vrot.slane %v827, %v831
      %v838 = vunpack.c.l.b16 %v823
      %v839 = vunpack.c.l.b16 %v824
      %v840 = vunpack.c.l.b16 %v825
      %v841 = vunpack.c.l.b16 %v826
      %v842 = vpack.c.b16 %v839, %v838
      %v843 = vpack.c.b16 %v841, %v840
      %v847 = vsel %vm492, %v815, 0
      %v850 = vsel %vm492, %v816, 0
      %v853 = vsel %vm492, %v817, 0
      %v856 = vsel %vm492, %v818, 0
      %v859 = vsel %vm492, %v819, 0
      %v862 = vsel %vm492, %v820, 0
      %v865 = vsel %vm492, %v821, 0
      %v868 = vsel %vm492, %v822, 0
      %870 = vmatprep.subr.bf16.mxu0 0
      %871 = vmatpush1.bf16.msra.mxu0 %v842
      %872 = vmatprep.subr.bf16.mxu0 0
      %873 = vmatpush1.bf16.msra.mxu0 %v843
      %874 = vmatprep.subr.bf16.mxu0 0
      %875 = vmatpush1.bf16.msra.mxu0 0
      %876 = vmatprep.subr.bf16.mxu0 0
      %877 = vmatpush1.bf16.msra.mxu0 0
      %878 = vmatprep.subr.bf16.mxu0 0
      %879 = vmatpush1.bf16.msra.mxu0 0
      %880 = vmatprep.subr.bf16.mxu0 0
      %881 = vmatpush1.bf16.msra.mxu0 0
      %882 = vmatprep.subr.bf16.mxu0 0
      %883 = vmatpush1.bf16.msra.mxu0 0
      %884 = vmatprep.subr.bf16.mxu0 0
      %885 = vmatpush1.bf16.msra.mxu0 0
      %886 = vmatprep.subr.bf16.mxu0 0
      %887 = vmatpush1.bf16.msra.mxu0 0
      %888 = vmatprep.subr.bf16.mxu0 0
      %889 = vmatpush1.bf16.msra.mxu0 0
      %890 = vmatprep.subr.bf16.mxu0 0
      %891 = vmatpush1.bf16.msra.mxu0 0
      %892 = vmatprep.subr.bf16.mxu0 0
      %893 = vmatpush1.bf16.msra.mxu0 0
      %894 = vmatprep.subr.bf16.mxu0 0
      %895 = vmatpush1.bf16.msra.mxu0 0
      %896 = vmatprep.subr.bf16.mxu0 0
      %897 = vmatpush1.bf16.msra.mxu0 0
      %898 = vmatprep.subr.bf16.mxu0 0
      %899 = vmatpush1.bf16.msra.mxu0 0
      %900 = vmatprep.subr.bf16.mxu0 0
      %901 = vmatpush1.bf16.msra.mxu0 0
      %902 = vmatprep.mubr.bf16.mxu0 0
      %903 = vmatmul.mubr.bf16.gmra.mrb[0].mxu0 %v847
      %v904 = vpop.f32.mrb[0].mxu0
      %v905 = vadd.f32 %v832, %v904
      %v906 = vpop.f32.mrb[0].mxu0
      %v907 = vpop.f32.mrb[0].mxu0
      %v908 = vadd.f32 %v832, %v907
      %v909 = vpop.f32.mrb[0].mxu0
      %910 = vmatprep.mubr.bf16.mxu0 0
      %911 = vmatmul.mubr.bf16.gmra.mrb[0].mxu0 %v850
      %v912 = vpop.f32.mrb[0].mxu0
      %v913 = vadd.f32 %v832, %v912
      %v914 = vpop.f32.mrb[0].mxu0
      %v915 = vpop.f32.mrb[0].mxu0
      %v916 = vadd.f32 %v832, %v915
      %v917 = vpop.f32.mrb[0].mxu0
      %918 = vmatprep.mubr.bf16.mxu0 0
      %919 = vmatmul.mubr.bf16.gmra.mrb[0].mxu0 %v853
      %v920 = vpop.f32.mrb[0].mxu0
      %v921 = vadd.f32 %v832, %v920
      %v922 = vpop.f32.mrb[0].mxu0
      %v923 = vpop.f32.mrb[0].mxu0
      %v924 = vadd.f32 %v832, %v923
      %v925 = vpop.f32.mrb[0].mxu0
      %926 = vmatprep.mubr.bf16.mxu0 0
      %927 = vmatmul.mubr.bf16.gmra.mrb[0].mxu0 %v856
      %v928 = vpop.f32.mrb[0].mxu0
      %v929 = vadd.f32 %v832, %v928
      %v930 = vpop.f32.mrb[0].mxu0
      %v931 = vpop.f32.mrb[0].mxu0
      %v932 = vadd.f32 %v832, %v931
      %v933 = vpop.f32.mrb[0].mxu0
      %934 = vmatprep.mubr.bf16.mxu0 0
      %935 = vmatmul.mubr.bf16.gmra.mrb[0].mxu0 %v859
      %v936 = vpop.f32.mrb[0].mxu0
      %v937 = vadd.f32 %v832, %v936
      %v938 = vpop.f32.mrb[0].mxu0
      %v939 = vpop.f32.mrb[0].mxu0
      %v940 = vadd.f32 %v832, %v939
      %v941 = vpop.f32.mrb[0].mxu0
      %942 = vmatprep.mubr.bf16.mxu0 0
      %943 = vmatmul.mubr.bf16.gmra.mrb[0].mxu0 %v862
      %v944 = vpop.f32.mrb[0].mxu0
      %v945 = vadd.f32 %v832, %v944
      %v946 = vpop.f32.mrb[0].mxu0
      %v947 = vpop.f32.mrb[0].mxu0
      %v948 = vadd.f32 %v832, %v947
      %v949 = vpop.f32.mrb[0].mxu0
      %950 = vmatprep.mubr.bf16.mxu0 0
      %951 = vmatmul.mubr.bf16.gmra.mrb[0].mxu0 %v865
      %v952 = vpop.f32.mrb[0].mxu0
      %v953 = vadd.f32 %v832, %v952
      %v954 = vpop.f32.mrb[0].mxu0
      %v955 = vpop.f32.mrb[0].mxu0
      %v956 = vadd.f32 %v832, %v955
      %v957 = vpop.f32.mrb[0].mxu0
      %958 = vmatprep.mubr.bf16.mxu0 0
      %959 = vmatmul.mubr.bf16.gmra.mrb[0].mxu0 %v868
      %v960 = vpop.f32.mrb[0].mxu0
      %v961 = vadd.f32 %v832, %v960
      %v962 = vpop.f32.mrb[0].mxu0
      %v963 = vpop.f32.mrb[0].mxu0
      %v964 = vadd.f32 %v832, %v963
      %v965 = vpop.f32.mrb[0].mxu0
      %966 = vdwg.mxu0
      %v967 = vmax.f32 %v905, 0.0
      %v968 = vmax.f32 %v908, 0.0
      %v969 = vmax.f32 %v913, 0.0
      %v970 = vmax.f32 %v916, 0.0
      %v971 = vmax.f32 %v921, 0.0
      %v972 = vmax.f32 %v924, 0.0
      %v973 = vmax.f32 %v929, 0.0
      %v974 = vmax.f32 %v932, 0.0
      %v975 = vmax.f32 %v937, 0.0
      %v976 = vmax.f32 %v940, 0.0
      %v977 = vmax.f32 %v945, 0.0
      %v978 = vmax.f32 %v948, 0.0
      %v979 = vmax.f32 %v953, 0.0
      %v980 = vmax.f32 %v956, 0.0
      %v981 = vmax.f32 %v961, 0.0
      %v982 = vmax.f32 %v964, 0.0
      %v983 = vpack.c.bf16 %v968, %v967
      %v984 = vpack.c.bf16 %v970, %v969
      %v985 = vpack.c.bf16 %v972, %v971
      %v986 = vpack.c.bf16 %v974, %v973
      %v987 = vpack.c.bf16 %v976, %v975
      %v988 = vpack.c.bf16 %v978, %v977
      %v989 = vpack.c.bf16 %v980, %v979
      %v990 = vpack.c.bf16 %v982, %v981
      %v991 = vld [vmem:[%s7] sm:$0xf]
      %v992 = vld [vmem:[%s7 + $0x4] sm:$0xf]
      %v993 = vld [vmem:[%s8] sm:$0x1]
      %v995 = vlaneseq
      %v996 = vshrl.u32 %v995, 7
      %v997 = vsub.s32 0, %v996
      %v998 = vrot.slane %v993, %v997
      %v1002 = vunpack.c.l.b16 %v991
      %v1003 = vunpack.c.l.b16 %v992
      %v1004 = vpack.c.b16 %v1003, %v1002
      %vm1006 = vcmask 130048
      %v1008 = vsel %vm1006, %v983, 0
      %v1011 = vsel %vm1006, %v984, 0
      %v1014 = vsel %vm1006, %v985, 0
      %v1017 = vsel %vm1006, %v986, 0
      %v1020 = vsel %vm1006, %v987, 0
      %v1023 = vsel %vm1006, %v988, 0
      %v1026 = vsel %vm1006, %v989, 0
      %v1029 = vsel %vm1006, %v990, 0
      %1031 = vmatprep.subr.bf16.mxu0 0
      %1032 = vmatpush1.bf16.msra.mxu0 %v1004
      %1033 = vmatprep.subr.bf16.mxu0 0
      %1034 = vmatpush1.bf16.msra.mxu0 0
      %1035 = vmatprep.subr.bf16.mxu0 0
      %1036 = vmatpush1.bf16.msra.mxu0 0
      %1037 = vmatprep.subr.bf16.mxu0 0
      %1038 = vmatpush1.bf16.msra.mxu0 0
      %1039 = vmatprep.subr.bf16.mxu0 0
      %1040 = vmatpush1.bf16.msra.mxu0 0
      %1041 = vmatprep.subr.bf16.mxu0 0
      %1042 = vmatpush1.bf16.msra.mxu0 0
      %1043 = vmatprep.subr.bf16.mxu0 0
      %1044 = vmatpush1.bf16.msra.mxu0 0
      %1045 = vmatprep.subr.bf16.mxu0 0
      %1046 = vmatpush1.bf16.msra.mxu0 0
      %1047 = vmatprep.subr.bf16.mxu0 0
      %1048 = vmatpush1.bf16.msra.mxu0 0
      %1049 = vmatprep.subr.bf16.mxu0 0
      %1050 = vmatpush1.bf16.msra.mxu0 0
      %1051 = vmatprep.subr.bf16.mxu0 0
      %1052 = vmatpush1.bf16.msra.mxu0 0
      %1053 = vmatprep.subr.bf16.mxu0 0
      %1054 = vmatpush1.bf16.msra.mxu0 0
      %1055 = vmatprep.subr.bf16.mxu0 0
      %1056 = vmatpush1.bf16.msra.mxu0 0
      %1057 = vmatprep.subr.bf16.mxu0 0
      %1058 = vmatpush1.bf16.msra.mxu0 0
      %1059 = vmatprep.subr.bf16.mxu0 0
      %1060 = vmatpush1.bf16.msra.mxu0 0
      %1061 = vmatprep.subr.bf16.mxu0 0
      %1062 = vmatpush1.bf16.msra.mxu0 0
      %1063 = vmatprep.mubr.bf16.mxu0 0
      %1064 = vmatmul.mubr.bf16.gmra.mrb[0].mxu0 %v1008
      %v1065 = vpop.f32.mrb[0].mxu0
      %v1066 = vadd.f32 %v998, %v1065
      %v1067 = vpop.f32.mrb[0].mxu0
      %v1068 = vpop.f32.mrb[0].mxu0
      %v1069 = vadd.f32 %v998, %v1068
      %v1070 = vpop.f32.mrb[0].mxu0
      %1071 = vmatprep.mubr.bf16.mxu0 0
      %1072 = vmatmul.mubr.bf16.gmra.mrb[0].mxu0 %v1011
      %v1073 = vpop.f32.mrb[0].mxu0
      %v1074 = vadd.f32 %v998, %v1073
      %v1075 = vpop.f32.mrb[0].mxu0
      %v1076 = vpop.f32.mrb[0].mxu0
      %v1077 = vadd.f32 %v998, %v1076
      %v1078 = vpop.f32.mrb[0].mxu0
      %1079 = vmatprep.mubr.bf16.mxu0 0
      %1080 = vmatmul.mubr.bf16.gmra.mrb[0].mxu0 %v1014
      %v1081 = vpop.f32.mrb[0].mxu0
      %v1082 = vadd.f32 %v998, %v1081
      %v1083 = vpop.f32.mrb[0].mxu0
      %v1084 = vpop.f32.mrb[0].mxu0
      %v1085 = vadd.f32 %v998, %v1084
      %v1086 = vpop.f32.mrb[0].mxu0
      %1087 = vmatprep.mubr.bf16.mxu0 0
      %1088 = vmatmul.mubr.bf16.gmra.mrb[0].mxu0 %v1017
      %v1089 = vpop.f32.mrb[0].mxu0
      %v1090 = vadd.f32 %v998, %v1089
      %v1091 = vpop.f32.mrb[0].mxu0
      %v1092 = vpop.f32.mrb[0].mxu0
      %v1093 = vadd.f32 %v998, %v1092
      %v1094 = vpop.f32.mrb[0].mxu0
      %1095 = vmatprep.mubr.bf16.mxu0 0
      %1096 = vmatmul.mubr.bf16.gmra.mrb[0].mxu0 %v1020
      %v1097 = vpop.f32.mrb[0].mxu0
      %v1098 = vadd.f32 %v998, %v1097
      %v1099 = vpop.f32.mrb[0].mxu0
      %v1100 = vpop.f32.mrb[0].mxu0
      %v1101 = vadd.f32 %v998, %v1100
      %v1102 = vpop.f32.mrb[0].mxu0
      %1103 = vmatprep.mubr.bf16.mxu0 0
      %1104 = vmatmul.mubr.bf16.gmra.mrb[0].mxu0 %v1023
      %v1105 = vpop.f32.mrb[0].mxu0
      %v1106 = vadd.f32 %v998, %v1105
      %v1107 = vpop.f32.mrb[0].mxu0
      %v1108 = vpop.f32.mrb[0].mxu0
      %v1109 = vadd.f32 %v998, %v1108
      %v1110 = vpop.f32.mrb[0].mxu0
      %1111 = vmatprep.mubr.bf16.mxu0 0
      %1112 = vmatmul.mubr.bf16.gmra.mrb[0].mxu0 %v1026
      %v1113 = vpop.f32.mrb[0].mxu0
      %v1114 = vadd.f32 %v998, %v1113
      %v1115 = vpop.f32.mrb[0].mxu0
      %v1116 = vpop.f32.mrb[0].mxu0
      %v1117 = vadd.f32 %v998, %v1116
      %v1118 = vpop.f32.mrb[0].mxu0
      %1119 = vmatprep.mubr.bf16.mxu0 0
      %1120 = vmatmul.mubr.bf16.gmra.mrb[0].mxu0 %v1029
      %v1121 = vpop.f32.mrb[0].mxu0
      %v1122 = vadd.f32 %v998, %v1121
      %v1123 = vpop.f32.mrb[0].mxu0
      %v1124 = vpop.f32.mrb[0].mxu0
      %v1125 = vadd.f32 %v998, %v1124
      %v1126 = vpop.f32.mrb[0].mxu0
      %1127 = vdwg.mxu0
      %v1128 = vmax.f32 %v1066, 0.0
      %v1129 = vmax.f32 %v1069, 0.0
      %v1130 = vmax.f32 %v1074, 0.0
      %v1131 = vmax.f32 %v1077, 0.0
      %v1132 = vmax.f32 %v1082, 0.0
      %v1133 = vmax.f32 %v1085, 0.0
      %v1134 = vmax.f32 %v1090, 0.0
      %v1135 = vmax.f32 %v1093, 0.0
      %v1136 = vmax.f32 %v1098, 0.0
      %v1137 = vmax.f32 %v1101, 0.0
      %v1138 = vmax.f32 %v1106, 0.0
      %v1139 = vmax.f32 %v1109, 0.0
      %v1140 = vmax.f32 %v1114, 0.0
      %v1141 = vmax.f32 %v1117, 0.0
      %v1142 = vmax.f32 %v1122, 0.0
      %v1143 = vmax.f32 %v1125, 0.0
      %v1144 = vpack.c.bf16 %v1129, %v1128
      %v1145 = vpack.c.bf16 %v1131, %v1130
      %v1146 = vpack.c.bf16 %v1133, %v1132
      %v1147 = vpack.c.bf16 %v1135, %v1134
      %v1148 = vpack.c.bf16 %v1137, %v1136
      %v1149 = vpack.c.bf16 %v1139, %v1138
      %v1150 = vpack.c.bf16 %v1141, %v1140
      %v1151 = vpack.c.bf16 %v1143, %v1142
      %v1152 = vld [vmem:[%s9] sm:$0xf]
      %v1153 = vld [vmem:[%s9 + $0x4] sm:$0xf]
      %v1154 = vld [vmem:[%s9 + $0x8] sm:$0xf]
      %v1155 = vld [vmem:[%s9 + $0xc] sm:$0xf]
      %v1156 = vld [vmem:[%s10] sm:$0x1]
      %v1158 = vlaneseq
      %v1159 = vshrl.u32 %v1158, 7
      %v1160 = vsub.s32 0, %v1159
      %v1161 = vrot.slane %v1156, %v1160
      %v1167 = vunpack.c.l.b16 %v1152
      %v1168 = vunpack.c.l.b16 %v1153
      %v1169 = vunpack.c.l.b16 %v1154
      %v1170 = vunpack.c.l.b16 %v1155
      %v1171 = vpack.c.b16 %v1168, %v1167
      %v1172 = vpack.c.b16 %v1170, %v1169
      %v1176 = vsel %vm492, %v1144, 0
      %v1179 = vsel %vm492, %v1145, 0
      %v1182 = vsel %vm492, %v1146, 0
      %v1185 = vsel %vm492, %v1147, 0
      %v1188 = vsel %vm492, %v1148, 0
      %v1191 = vsel %vm492, %v1149, 0
      %v1194 = vsel %vm492, %v1150, 0
      %v1197 = vsel %vm492, %v1151, 0
      %1199 = vmatprep.subr.bf16.mxu0 0
      %1200 = vmatpush1.bf16.msra.mxu0 %v1171
      %1201 = vmatprep.subr.bf16.mxu0 0
      %1202 = vmatpush1.bf16.msra.mxu0 %v1172
      %1203 = vmatprep.subr.bf16.mxu0 0
      %1204 = vmatpush1.bf16.msra.mxu0 0
      %1205 = vmatprep.subr.bf16.mxu0 0
      %1206 = vmatpush1.bf16.msra.mxu0 0
      %1207 = vmatprep.subr.bf16.mxu0 0
      %1208 = vmatpush1.bf16.msra.mxu0 0
      %1209 = vmatprep.subr.bf16.mxu0 0
      %1210 = vmatpush1.bf16.msra.mxu0 0
      %1211 = vmatprep.subr.bf16.mxu0 0
      %1212 = vmatpush1.bf16.msra.mxu0 0
      %1213 = vmatprep.subr.bf16.mxu0 0
      %1214 = vmatpush1.bf16.msra.mxu0 0
      %1215 = vmatprep.subr.bf16.mxu0 0
      %1216 = vmatpush1.bf16.msra.mxu0 0
      %1217 = vmatprep.subr.bf16.mxu0 0
      %1218 = vmatpush1.bf16.msra.mxu0 0
      %1219 = vmatprep.subr.bf16.mxu0 0
      %1220 = vmatpush1.bf16.msra.mxu0 0
      %1221 = vmatprep.subr.bf16.mxu0 0
      %1222 = vmatpush1.bf16.msra.mxu0 0
      %1223 = vmatprep.subr.bf16.mxu0 0
      %1224 = vmatpush1.bf16.msra.mxu0 0
      %1225 = vmatprep.subr.bf16.mxu0 0
      %1226 = vmatpush1.bf16.msra.mxu0 0
      %1227 = vmatprep.subr.bf16.mxu0 0
      %1228 = vmatpush1.bf16.msra.mxu0 0
      %1229 = vmatprep.subr.bf16.mxu0 0
      %1230 = vmatpush1.bf16.msra.mxu0 0
      %1231 = vmatprep.mubr.bf16.mxu0 0
      %1232 = vmatmul.mubr.bf16.gmra.mrb[0].mxu0 %v1176
      %v1233 = vpop.f32.mrb[0].mxu0
      %v1234 = vadd.f32 %v1161, %v1233
      %v1235 = vpop.f32.mrb[0].mxu0
      %v1236 = vpop.f32.mrb[0].mxu0
      %v1237 = vadd.f32 %v1161, %v1236
      %v1238 = vpop.f32.mrb[0].mxu0
      %1239 = vmatprep.mubr.bf16.mxu0 0
      %1240 = vmatmul.mubr.bf16.gmra.mrb[0].mxu0 %v1179
      %v1241 = vpop.f32.mrb[0].mxu0
      %v1242 = vadd.f32 %v1161, %v1241
      %v1243 = vpop.f32.mrb[0].mxu0
      %v1244 = vpop.f32.mrb[0].mxu0
      %v1245 = vadd.f32 %v1161, %v1244
      %v1246 = vpop.f32.mrb[0].mxu0
      %1247 = vmatprep.mubr.bf16.mxu0 0
      %1248 = vmatmul.mubr.bf16.gmra.mrb[0].mxu0 %v1182
      %v1249 = vpop.f32.mrb[0].mxu0
      %v1250 = vadd.f32 %v1161, %v1249
      %v1251 = vpop.f32.mrb[0].mxu0
      %v1252 = vpop.f32.mrb[0].mxu0
      %v1253 = vadd.f32 %v1161, %v1252
      %v1254 = vpop.f32.mrb[0].mxu0
      %1255 = vmatprep.mubr.bf16.mxu0 0
      %1256 = vmatmul.mubr.bf16.gmra.mrb[0].mxu0 %v1185
      %v1257 = vpop.f32.mrb[0].mxu0
      %v1258 = vadd.f32 %v1161, %v1257
      %v1259 = vpop.f32.mrb[0].mxu0
      %v1260 = vpop.f32.mrb[0].mxu0
      %v1261 = vadd.f32 %v1161, %v1260
      %v1262 = vpop.f32.mrb[0].mxu0
      %1263 = vmatprep.mubr.bf16.mxu0 0
      %1264 = vmatmul.mubr.bf16.gmra.mrb[0].mxu0 %v1188
      %v1265 = vpop.f32.mrb[0].mxu0
      %v1266 = vadd.f32 %v1161, %v1265
      %v1267 = vpop.f32.mrb[0].mxu0
      %v1268 = vpop.f32.mrb[0].mxu0
      %v1269 = vadd.f32 %v1161, %v1268
      %v1270 = vpop.f32.mrb[0].mxu0
      %1271 = vmatprep.mubr.bf16.mxu0 0
      %1272 = vmatmul.mubr.bf16.gmra.mrb[0].mxu0 %v1191
      %v1273 = vpop.f32.mrb[0].mxu0
      %v1274 = vadd.f32 %v1161, %v1273
      %v1275 = vpop.f32.mrb[0].mxu0
      %v1276 = vpop.f32.mrb[0].mxu0
      %v1277 = vadd.f32 %v1161, %v1276
      %v1278 = vpop.f32.mrb[0].mxu0
      %1279 = vmatprep.mubr.bf16.mxu0 0
      %1280 = vmatmul.mubr.bf16.gmra.mrb[0].mxu0 %v1194
      %v1281 = vpop.f32.mrb[0].mxu0
      %v1282 = vadd.f32 %v1161, %v1281
      %v1283 = vpop.f32.mrb[0].mxu0
      %v1284 = vpop.f32.mrb[0].mxu0
      %v1285 = vadd.f32 %v1161, %v1284
      %v1286 = vpop.f32.mrb[0].mxu0
      %1287 = vmatprep.mubr.bf16.mxu0 0
      %1288 = vmatmul.mubr.bf16.gmra.mrb[0].mxu0 %v1197
      %v1289 = vpop.f32.mrb[0].mxu0
      %v1290 = vadd.f32 %v1161, %v1289
      %v1291 = vpop.f32.mrb[0].mxu0
      %v1292 = vpop.f32.mrb[0].mxu0
      %v1293 = vadd.f32 %v1161, %v1292
      %v1294 = vpop.f32.mrb[0].mxu0
      %1295 = vdwg.mxu0
      %v1296 = vmax.f32 %v1234, 0.0
      %v1297 = vmax.f32 %v1237, 0.0
      %v1298 = vmax.f32 %v1242, 0.0
      %v1299 = vmax.f32 %v1245, 0.0
      %v1300 = vmax.f32 %v1250, 0.0
      %v1301 = vmax.f32 %v1253, 0.0
      %v1302 = vmax.f32 %v1258, 0.0
      %v1303 = vmax.f32 %v1261, 0.0
      %v1304 = vmax.f32 %v1266, 0.0
      %v1305 = vmax.f32 %v1269, 0.0
      %v1306 = vmax.f32 %v1274, 0.0
      %v1307 = vmax.f32 %v1277, 0.0
      %v1308 = vmax.f32 %v1282, 0.0
      %v1309 = vmax.f32 %v1285, 0.0
      %v1310 = vmax.f32 %v1290, 0.0
      %v1311 = vmax.f32 %v1293, 0.0
      %v1312 = vpack.c.bf16 %v1297, %v1296
      %v1313 = vpack.c.bf16 %v1299, %v1298
      %v1314 = vpack.c.bf16 %v1301, %v1300
      %v1315 = vpack.c.bf16 %v1303, %v1302
      %v1316 = vpack.c.bf16 %v1305, %v1304
      %v1317 = vpack.c.bf16 %v1307, %v1306
      %v1318 = vpack.c.bf16 %v1309, %v1308
      %v1319 = vpack.c.bf16 %v1311, %v1310
      %v1320 = vld [vmem:[%s11] sm:$0xf]
      %v1321 = vld [vmem:[%s11 + $0x4] sm:$0xf]
      %v1322 = vld [vmem:[%s11 + $0x8] sm:$0xf]
      %v1323 = vld [vmem:[%s11 + $0xc] sm:$0xf]
      %v1324 = vld [vmem:[%s11 + $0x10] sm:$0xf]
      %v1325 = vld [vmem:[%s11 + $0x14] sm:$0xf]
      %v1326 = vld [vmem:[%s11 + $0x18] sm:$0xf]
      %v1327 = vld [vmem:[%s11 + $0x1c] sm:$0xf]
      %v1328 = vld [vmem:[%s12] sm:$0x1]
      %v1330 = vlaneseq
      %v1331 = vshrl.u32 %v1330, 7
      %v1332 = vsub.s32 0, %v1331
      %v1333 = vrot.slane %v1328, %v1332
      %v1343 = vunpack.c.l.b16 %v1320
      %v1344 = vunpack.c.l.b16 %v1321
      %v1345 = vunpack.c.l.b16 %v1322
      %v1346 = vunpack.c.l.b16 %v1323
      %v1347 = vunpack.c.l.b16 %v1324
      %v1348 = vunpack.c.l.b16 %v1325
      %v1349 = vunpack.c.l.b16 %v1326
      %v1350 = vunpack.c.l.b16 %v1327
      %v1351 = vpack.c.b16 %v1344, %v1343
      %v1352 = vpack.c.b16 %v1346, %v1345
      %v1353 = vpack.c.b16 %v1348, %v1347
      %v1354 = vpack.c.b16 %v1350, %v1349
      %v1360 = vsel %vm677, %v1312, 0
      %v1363 = vsel %vm677, %v1313, 0
      %v1366 = vsel %vm677, %v1314, 0
      %v1369 = vsel %vm677, %v1315, 0
      %v1372 = vsel %vm677, %v1316, 0
      %v1375 = vsel %vm677, %v1317, 0
      %v1378 = vsel %vm677, %v1318, 0
      %v1381 = vsel %vm677, %v1319, 0
      %1383 = vmatprep.subr.bf16.mxu0 0
      %1384 = vmatpush1.bf16.msra.mxu0 %v1351
      %1385 = vmatprep.subr.bf16.mxu0 0
      %1386 = vmatpush1.bf16.msra.mxu0 %v1352
      %1387 = vmatprep.subr.bf16.mxu0 0
      %1388 = vmatpush1.bf16.msra.mxu0 %v1353
      %1389 = vmatprep.subr.bf16.mxu0 0
      %1390 = vmatpush1.bf16.msra.mxu0 %v1354
      %1391 = vmatprep.subr.bf16.mxu0 0
      %1392 = vmatpush1.bf16.msra.mxu0 0
      %1393 = vmatprep.subr.bf16.mxu0 0
      %1394 = vmatpush1.bf16.msra.mxu0 0
      %1395 = vmatprep.subr.bf16.mxu0 0
      %1396 = vmatpush1.bf16.msra.mxu0 0
      %1397 = vmatprep.subr.bf16.mxu0 0
      %1398 = vmatpush1.bf16.msra.mxu0 0
      %1399 = vmatprep.subr.bf16.mxu0 0
      %1400 = vmatpush1.bf16.msra.mxu0 0
      %1401 = vmatprep.subr.bf16.mxu0 0
      %1402 = vmatpush1.bf16.msra.mxu0 0
      %1403 = vmatprep.subr.bf16.mxu0 0
      %1404 = vmatpush1.bf16.msra.mxu0 0
      %1405 = vmatprep.subr.bf16.mxu0 0
      %1406 = vmatpush1.bf16.msra.mxu0 0
      %1407 = vmatprep.subr.bf16.mxu0 0
      %1408 = vmatpush1.bf16.msra.mxu0 0
      %1409 = vmatprep.subr.bf16.mxu0 0
      %1410 = vmatpush1.bf16.msra.mxu0 0
      %1411 = vmatprep.subr.bf16.mxu0 0
      %1412 = vmatpush1.bf16.msra.mxu0 0
      %1413 = vmatprep.subr.bf16.mxu0 0
      %1414 = vmatpush1.bf16.msra.mxu0 0
      %1415 = vmatprep.mubr.bf16.mxu0 0
      %1416 = vmatmul.mubr.bf16.gmra.mrb[0].mxu0 %v1360
      %v1417 = vpop.f32.mrb[0].mxu0
      %v1418 = vadd.f32 %v1333, %v1417
      %v1419 = vpop.f32.mrb[0].mxu0
      %v1420 = vpop.f32.mrb[0].mxu0
      %v1421 = vadd.f32 %v1333, %v1420
      %v1422 = vpop.f32.mrb[0].mxu0
      %1423 = vmatprep.mubr.bf16.mxu0 0
      %1424 = vmatmul.mubr.bf16.gmra.mrb[0].mxu0 %v1363
      %v1425 = vpop.f32.mrb[0].mxu0
      %v1426 = vadd.f32 %v1333, %v1425
      %v1427 = vpop.f32.mrb[0].mxu0
      %v1428 = vpop.f32.mrb[0].mxu0
      %v1429 = vadd.f32 %v1333, %v1428
      %v1430 = vpop.f32.mrb[0].mxu0
      %1431 = vmatprep.mubr.bf16.mxu0 0
      %1432 = vmatmul.mubr.bf16.gmra.mrb[0].mxu0 %v1366
      %v1433 = vpop.f32.mrb[0].mxu0
      %v1434 = vadd.f32 %v1333, %v1433
      %v1435 = vpop.f32.mrb[0].mxu0
      %v1436 = vpop.f32.mrb[0].mxu0
      %v1437 = vadd.f32 %v1333, %v1436
      %v1438 = vpop.f32.mrb[0].mxu0
      %1439 = vmatprep.mubr.bf16.mxu0 0
      %1440 = vmatmul.mubr.bf16.gmra.mrb[0].mxu0 %v1369
      %v1441 = vpop.f32.mrb[0].mxu0
      %v1442 = vadd.f32 %v1333, %v1441
      %v1443 = vpop.f32.mrb[0].mxu0
      %v1444 = vpop.f32.mrb[0].mxu0
      %v1445 = vadd.f32 %v1333, %v1444
      %v1446 = vpop.f32.mrb[0].mxu0
      %1447 = vmatprep.mubr.bf16.mxu0 0
      %1448 = vmatmul.mubr.bf16.gmra.mrb[0].mxu0 %v1372
      %v1449 = vpop.f32.mrb[0].mxu0
      %v1450 = vadd.f32 %v1333, %v1449
      %v1451 = vpop.f32.mrb[0].mxu0
      %v1452 = vpop.f32.mrb[0].mxu0
      %v1453 = vadd.f32 %v1333, %v1452
      %v1454 = vpop.f32.mrb[0].mxu0
      %1455 = vmatprep.mubr.bf16.mxu0 0
      %1456 = vmatmul.mubr.bf16.gmra.mrb[0].mxu0 %v1375
      %v1457 = vpop.f32.mrb[0].mxu0
      %v1458 = vadd.f32 %v1333, %v1457
      %v1459 = vpop.f32.mrb[0].mxu0
      %v1460 = vpop.f32.mrb[0].mxu0
      %v1461 = vadd.f32 %v1333, %v1460
      %v1462 = vpop.f32.mrb[0].mxu0
      %1463 = vmatprep.mubr.bf16.mxu0 0
      %1464 = vmatmul.mubr.bf16.gmra.mrb[0].mxu0 %v1378
      %v1465 = vpop.f32.mrb[0].mxu0
      %v1466 = vadd.f32 %v1333, %v1465
      %v1467 = vpop.f32.mrb[0].mxu0
      %v1468 = vpop.f32.mrb[0].mxu0
      %v1469 = vadd.f32 %v1333, %v1468
      %v1470 = vpop.f32.mrb[0].mxu0
      %1471 = vmatprep.mubr.bf16.mxu0 0
      %1472 = vmatmul.mubr.bf16.gmra.mrb[0].mxu0 %v1381
      %v1473 = vpop.f32.mrb[0].mxu0
      %v1474 = vadd.f32 %v1333, %v1473
      %v1475 = vpop.f32.mrb[0].mxu0
      %v1476 = vpop.f32.mrb[0].mxu0
      %v1477 = vadd.f32 %v1333, %v1476
      %v1478 = vpop.f32.mrb[0].mxu0
      %1479 = vdwg.mxu0
      %v1480 = vsub.f32 0.0, %v1418
      %v1481 = vsub.f32 0.0, %v1421
      %v1482 = vsub.f32 0.0, %v1426
      %v1483 = vsub.f32 0.0, %v1429
      %v1484 = vsub.f32 0.0, %v1434
      %v1485 = vsub.f32 0.0, %v1437
      %v1486 = vsub.f32 0.0, %v1442
      %v1487 = vsub.f32 0.0, %v1445
      %v1488 = vsub.f32 0.0, %v1450
      %v1489 = vsub.f32 0.0, %v1453
      %v1490 = vsub.f32 0.0, %v1458
      %v1491 = vsub.f32 0.0, %v1461
      %v1492 = vsub.f32 0.0, %v1466
      %v1493 = vsub.f32 0.0, %v1469
      %v1494 = vsub.f32 0.0, %v1474
      %v1495 = vsub.f32 0.0, %v1477
      %v1496 = vmul.f32 %v1480, 1.442695
      %v1497 = vpow.pop %v1496
      %v1498 = vmul.f32 %v1481, 1.442695
      %v1499 = vpow.pop %v1498
      %v1500 = vmul.f32 %v1482, 1.442695
      %v1501 = vpow.pop %v1500
      %v1502 = vmul.f32 %v1483, 1.442695
      %v1503 = vpow.pop %v1502
      %v1504 = vmul.f32 %v1484, 1.442695
      %v1505 = vpow.pop %v1504
      %v1506 = vmul.f32 %v1485, 1.442695
      %v1507 = vpow.pop %v1506
      %v1508 = vmul.f32 %v1486, 1.442695
      %v1509 = vpow.pop %v1508
      %v1510 = vmul.f32 %v1487, 1.442695
      %v1511 = vpow.pop %v1510
      %v1512 = vmul.f32 %v1488, 1.442695
      %v1513 = vpow.pop %v1512
      %v1514 = vmul.f32 %v1489, 1.442695
      %v1515 = vpow.pop %v1514
      %v1516 = vmul.f32 %v1490, 1.442695
      %v1517 = vpow.pop %v1516
      %v1518 = vmul.f32 %v1491, 1.442695
      %v1519 = vpow.pop %v1518
      %v1520 = vmul.f32 %v1492, 1.442695
      %v1521 = vpow.pop %v1520
      %v1522 = vmul.f32 %v1493, 1.442695
      %v1523 = vpow.pop %v1522
      %v1524 = vmul.f32 %v1494, 1.442695
      %v1525 = vpow.pop %v1524
      %v1526 = vmul.f32 %v1495, 1.442695
      %v1527 = vpow.pop %v1526
      %v1528 = vadd.f32 %v1497, 1.0
      %v1529 = vadd.f32 %v1499, 1.0
      %v1530 = vadd.f32 %v1501, 1.0
      %v1531 = vadd.f32 %v1503, 1.0
      %v1532 = vadd.f32 %v1505, 1.0
      %v1533 = vadd.f32 %v1507, 1.0
      %v1534 = vadd.f32 %v1509, 1.0
      %v1535 = vadd.f32 %v1511, 1.0
      %v1536 = vadd.f32 %v1513, 1.0
      %v1537 = vadd.f32 %v1515, 1.0
      %v1538 = vadd.f32 %v1517, 1.0
      %v1539 = vadd.f32 %v1519, 1.0
      %v1540 = vadd.f32 %v1521, 1.0
      %v1541 = vadd.f32 %v1523, 1.0
      %v1542 = vadd.f32 %v1525, 1.0
      %v1543 = vadd.f32 %v1527, 1.0
      %v1544 = vrcp.pop %v1528
      %v1545 = vrcp.pop %v1529
      %v1546 = vrcp.pop %v1530
      %v1547 = vrcp.pop %v1531
      %v1548 = vrcp.pop %v1532
      %v1549 = vrcp.pop %v1533
      %v1550 = vrcp.pop %v1534
      %v1551 = vrcp.pop %v1535
      %v1552 = vrcp.pop %v1536
      %v1553 = vrcp.pop %v1537
      %v1554 = vrcp.pop %v1538
      %v1555 = vrcp.pop %v1539
      %v1556 = vrcp.pop %v1540
      %v1557 = vrcp.pop %v1541
      %v1558 = vrcp.pop %v1542
      %v1559 = vrcp.pop %v1543
      %1560 = vst.msk [vmem:[%s442] sm:$0xff] %vm492, %v1544
      %1561 = vst.msk [vmem:[%s442 + $0x8] sm:$0xff] %vm492, %v1545
      %1562 = vst.msk [vmem:[%s442 + $0x10] sm:$0xff] %vm492, %v1546
      %1563 = vst.msk [vmem:[%s442 + $0x18] sm:$0xff] %vm492, %v1547
      %1564 = vst.msk [vmem:[%s442 + $0x20] sm:$0xff] %vm492, %v1548
      %1565 = vst.msk [vmem:[%s442 + $0x28] sm:$0xff] %vm492, %v1549
      %1566 = vst.msk [vmem:[%s442 + $0x30] sm:$0xff] %vm492, %v1550
      %1567 = vst.msk [vmem:[%s442 + $0x38] sm:$0xff] %vm492, %v1551
      %1568 = vst.msk [vmem:[%s442 + $0x40] sm:$0xff] %vm492, %v1552
      %1569 = vst.msk [vmem:[%s442 + $0x48] sm:$0xff] %vm492, %v1553
      %1570 = vst.msk [vmem:[%s442 + $0x50] sm:$0xff] %vm492, %v1554
      %1571 = vst.msk [vmem:[%s442 + $0x58] sm:$0xff] %vm492, %v1555
      %1572 = vst.msk [vmem:[%s442 + $0x60] sm:$0xff] %vm492, %v1556
      %1573 = vst.msk [vmem:[%s442 + $0x68] sm:$0xff] %vm492, %v1557
      %1574 = vst.msk [vmem:[%s442 + $0x70] sm:$0xff] %vm492, %v1558
      %1575 = vst.msk [vmem:[%s442 + $0x78] sm:$0xff] %vm492, %v1559
      %s1576 = smul.u32 16, %s24
      %p1577 = scmp.lt.s32.totalorder %s1576, 31
      %s1578 = scalar_select %p1577, %s1576, 31
      %s1579 = smul.addr %s1578, 8
      %s1580 = scalar_lea.vmem %s13, %s1579
      // Predicated region
      $region73: #{_forward_impl.1} parent=71 // pred_check
        %p1581 = pneg %p320
      $region74: #{_forward_impl.1} parent=71 // pred_check_branch
        %1583 = sbr.rel (%p1581) target = $region76
      $region75: #{_forward_impl.1} parent=71 // pred_region
        %s1584 = smul.u32 16, %s24
      $region76: #{_forward_impl.1} parent=71 // pred_fallthru
        _
    $region72: #{_forward_impl.1} parent=5 // pred_fallthru
      _
    %p1585 = scmp.le.s32.totalorder 2, %s19
    // Predicated region
    $region77: #{_forward_impl.1} parent=5 // pred_check
      %p1586 = pneg %p1585
    $region78: #{_forward_impl.1} parent=5 // pred_check_branch
      %1588 = sbr.rel (%p1586) target = $region80
    $region79: #{_forward_impl.1} parent=5 // pred_region
      %s1589 = ssub.s32 %s19, 2
      // Predicated region
      $region81: #{_forward_impl.1} parent=79 // pred_check
        %p1590 = pneg %p326
      $region82: #{_forward_impl.1} parent=79 // pred_check_branch
        %1592 = sbr.rel (%p1590) target = $region84
      $region83: #{_forward_impl.1} parent=79 // pred_region
        %s1593 = smul.u32 16, %s25
        %p1594 = scmp.lt.s32.totalorder %s1593, 31
        %s1595 = scalar_select %p1594, %s1593, 31
        %s1596 = smul.addr %s1595, 8
        %s1597 = scalar_lea.vmem %s13, %s1596
      $region84: #{_forward_impl.1} parent=79 // pred_fallthru
        _
    $region80: #{_forward_impl.1} parent=5 // pred_fallthru
      _
  $region6: #{_forward_impl.1} parent=0 // loop_footer
    %s23 = sadd.s32 1, %s19
  $region7: #{_forward_impl.1} parent=0 // loop_footer_branch
    %18 = sbr.rel target = $region3
  $region8: #{_forward_impl.1} parent=0 // loop_exit
    _

</llo_original>
